<compile_context>
chip_gen: v7x
topology: tpu7x:2x2x1
jax: 0.10.0
libtpu: 0.0.40
codegen_flags: <defaults>
</compile_context>

<pallas_src>
import math

import jax
import jax.numpy as jnp
from jax.experimental import pallas as pl

# ---- model dimensions (small, synthetic) -------------------------------
B = 2                # batch
S = 8                # sequence length
H = 32               # hidden size
NUM_HEADS = 4
HEAD_DIM = H // NUM_HEADS
INTER = 64           # FFN intermediate size
NUM_LAYERS = 2
VOCAB = 100
MAX_POS = 64
NUM_TYPE = 3         # num_type_labels
NUM_IMPORTANT = 2    # num_important_labels
OUT_PAD = 128        # lane-dense padded width for the fused head output
LN_EPS = 1e-5
BS = B * S
NEG = -1e9


# ------------------------------------------------------------------------
# helpers
# ------------------------------------------------------------------------
def _layernorm(x, gamma, beta):
    # f32 math on the VPU/XLU; gamma/beta broadcast from (1, H)
    mean = jnp.mean(x, axis=-1, keepdims=True)
    var = jnp.mean((x - mean) ** 2, axis=-1, keepdims=True)
    return (x - mean) * jax.lax.rsqrt(var + LN_EPS) * gamma + beta


# ------------------------------------------------------------------------
# single fused Pallas kernel: embedding LN -> 2 encoder layers -> heads
# ------------------------------------------------------------------------
def fused_forward_kernel(emb_ref, bias_ref, eg_ref, eb_ref,
                         wqkv_ref, bqkv_ref, wo_ref, bo_ref,
                         g1_ref, be1_ref, w1_ref, b1_ref,
                         w2_ref, b2_ref, g2_ref, be2_ref,
                         wh_ref, bh_ref, out_ref):
    # x: (B*S, H) f32 activations (batch folded into sublanes)
    x = _layernorm(emb_ref[...], eg_ref[...], eb_ref[...])
    bias = bias_ref[...]                        # (B*S, B*S) block-diag + padding
    scale = 1.0 / math.sqrt(HEAD_DIM)

    for l in range(NUM_LAYERS):                 # static unroll (2 layers)
        # fused QKV projection: one MXU push with 3H output lanes
        qkv = jnp.dot(x.astype(jnp.bfloat16), wqkv_ref[l],
                      preferred_element_type=jnp.float32) + bqkv_ref[l]

        ctx_heads = []
        for h in range(NUM_HEADS):              # static unroll over heads
            lo = h * HEAD_DIM
            q_h = qkv[:, lo:lo + HEAD_DIM].astype(jnp.bfloat16)
            k_h = qkv[:, H + lo:H + lo + HEAD_DIM].astype(jnp.bfloat16)
            v_h = qkv[:, 2 * H + lo:2 * H + lo + HEAD_DIM].astype(jnp.bfloat16)

            # whole folded batch at once; block-diagonal bias keeps batches
            # from attending to each other and applies key padding
            s = (jnp.dot(q_h, k_h.T, preferred_element_type=jnp.float32) * scale
                 + bias)
            s = s - jnp.max(s, axis=-1, keepdims=True)
            p = jnp.exp(s)
            p = p * pl.reciprocal(jnp.sum(p, axis=-1, keepdims=True), approx=True)
            ctx_heads.append(jnp.dot(p.astype(jnp.bfloat16), v_h,
                                     preferred_element_type=jnp.float32))

        ctx = jnp.concatenate(ctx_heads, axis=-1)           # (B*S, H)
        attn_out = jnp.dot(ctx.astype(jnp.bfloat16), wo_ref[l],
                           preferred_element_type=jnp.float32) + bo_ref[l]

        h1 = _layernorm(x + attn_out, g1_ref[l], be1_ref[l])

        # TODO(synk): HF RoBERTa uses exact erf GELU; tanh approximation used here.
        ff = jnp.dot(h1.astype(jnp.bfloat16), w1_ref[l],
                     preferred_element_type=jnp.float32) + b1_ref[l]
        ff = jax.nn.gelu(ff, approximate=True)
        ff = jnp.dot(ff.astype(jnp.bfloat16), w2_ref[l],
                     preferred_element_type=jnp.float32) + b2_ref[l]

        x = _layernorm(h1 + ff, g2_ref[l], be2_ref[l])

    # fused classifier heads, lane-dense (B*S, 128) unmasked store;
    # dropout (eval mode) == identity.  CLS rows are selected in the wrapper.
    out_ref[...] = (jnp.dot(x.astype(jnp.bfloat16), wh_ref[...],
                            preferred_element_type=jnp.float32) + bh_ref[...])


# ------------------------------------------------------------------------
# parameters (deterministic synthetic init; no checkpoint loading)
# ------------------------------------------------------------------------
def init_params(key):
    # TODO(synk): pretrained RoBERTa weights (AutoModel.from_pretrained) cannot
    # be reproduced; deterministic synthetic weights stand in.
    keys = iter(jax.random.split(key, 64))

    def nrm(shape, std=0.02):
        return (std * jax.random.normal(next(keys), shape)).astype(jnp.float32)

    def zeros(shape):
        return jnp.zeros(shape, jnp.float32)

    def ones(shape):
        return jnp.ones(shape, jnp.float32)

    # both classifier heads packed into one lane-dense padded weight
    wt = nrm((H, NUM_TYPE))
    wi = nrm((H, NUM_IMPORTANT))
    w_heads = jnp.zeros((H, OUT_PAD), jnp.float32)
    w_heads = w_heads.at[:, :NUM_TYPE].set(wt)
    w_heads = w_heads.at[:, NUM_TYPE:NUM_TYPE + NUM_IMPORTANT].set(wi)

    return {
        "word_emb": nrm((VOCAB, H)),
        "pos_emb": nrm((MAX_POS, H)),
        "emb_ln_g": ones((1, H)),
        "emb_ln_b": zeros((1, H)),
        # per-layer weights stacked on a leading layer axis; matmul weights bf16
        "wqkv": nrm((NUM_LAYERS, H, 3 * H)).astype(jnp.bfloat16),
        "bqkv": zeros((NUM_LAYERS, 1, 3 * H)),
        "wo": nrm((NUM_LAYERS, H, H)).astype(jnp.bfloat16),
        "bo": zeros((NUM_LAYERS, 1, H)),
        "g1": ones((NUM_LAYERS, 1, H)),
        "be1": zeros((NUM_LAYERS, 1, H)),
        "w1": nrm((NUM_LAYERS, H, INTER)).astype(jnp.bfloat16),
        "b1": zeros((NUM_LAYERS, 1, INTER)),
        "w2": nrm((NUM_LAYERS, INTER, H)).astype(jnp.bfloat16),
        "b2": zeros((NUM_LAYERS, 1, H)),
        "g2": ones((NUM_LAYERS, 1, H)),
        "be2": zeros((NUM_LAYERS, 1, H)),
        "w_heads": w_heads.astype(jnp.bfloat16),
        "b_heads": zeros((1, OUT_PAD)),
    }


_STACKED_ORDER = ("wqkv", "bqkv", "wo", "bo", "g1", "be1",
                  "w1", "b1", "w2", "b2", "g2", "be2")


# ------------------------------------------------------------------------
# forward pass (mirrors MultiTaskModel.forward, inference mode)
# ------------------------------------------------------------------------
def multitask_forward(params, input_ids, attention_mask):
    # embedding gather is glue (plain JAX); everything else is one Pallas call
    pos_ids = jnp.arange(S)
    emb = params["word_emb"][input_ids] + params["pos_emb"][pos_ids][None, :, :]
    emb = emb.reshape(BS, H).astype(jnp.float32)

    # block-diagonal attention bias over the folded (B*S) axis:
    # 0 where (same batch AND key not padded), -1e9 otherwise
    batch_ids = jnp.repeat(jnp.arange(B), S)                       # (B*S,)
    same_batch = (batch_ids[:, None] == batch_ids[None, :]).astype(jnp.float32)
    key_valid = attention_mask.astype(jnp.float32).reshape(1, BS)  # (1, B*S)
    attn_bias = (1.0 - same_batch * key_valid) * NEG               # (B*S, B*S)

    stacked = [params[name] for name in _STACKED_ORDER]

    # single pallas_call, no grid: all tensors are tiny and fully VMEM-resident
    logits_all = pl.pallas_call(
        fused_forward_kernel,
        out_shape=jax.ShapeDtypeStruct((BS, OUT_PAD), jnp.float32),
    )(emb, attn_bias, params["emb_ln_g"], params["emb_ln_b"],
      *stacked, params["w_heads"], params["b_heads"])

    # select the [CLS] row of each batch element and split the padded slab
    cls_logits = logits_all.reshape(B, S, OUT_PAD)[:, 0, :]
    type_logits = cls_logits[:, :NUM_TYPE]
    important_logits = cls_logits[:, NUM_TYPE:NUM_TYPE + NUM_IMPORTANT]
    return type_logits, important_logits


# ------------------------------------------------------------------------
if __name__ == "__main__":
    key = jax.random.PRNGKey(0)
    pkey, ikey = jax.random.split(key)

    params = init_params(pkey)
    input_ids = jax.random.randint(ikey, (B, S), 0, VOCAB, dtype=jnp.int32)
    attention_mask = jnp.ones((B, S), jnp.int32).at[1, 6:].set(0)  # pad tail of seq 1

    fwd = jax.jit(multitask_forward)
    type_logits, important_logits = fwd(params, input_ids, attention_mask)
    jax.block_until_ready((type_logits, important_logits))

    assert type_logits.shape == (B, NUM_TYPE)
    assert important_logits.shape == (B, NUM_IMPORTANT)
    print("KERNEL_OK")
</pallas_src>

<mosaic_0001>
module attributes {stable_mosaic.version = 11 : i64} {
  func.func @fused_forward_kernel(%arg0: memref<16x32xf32, #tpu.memory_space<vmem>>, %arg1: memref<16x16xf32, #tpu.memory_space<vmem>>, %arg2: memref<1x32xf32, #tpu.memory_space<vmem>>, %arg3: memref<1x32xf32, #tpu.memory_space<vmem>>, %arg4: memref<2x32x96xbf16, #tpu.memory_space<vmem>>, %arg5: memref<2x1x96xf32, #tpu.memory_space<vmem>>, %arg6: memref<2x32x32xbf16, #tpu.memory_space<vmem>>, %arg7: memref<2x1x32xf32, #tpu.memory_space<vmem>>, %arg8: memref<2x1x32xf32, #tpu.memory_space<vmem>>, %arg9: memref<2x1x32xf32, #tpu.memory_space<vmem>>, %arg10: memref<2x32x64xbf16, #tpu.memory_space<vmem>>, %arg11: memref<2x1x64xf32, #tpu.memory_space<vmem>>, %arg12: memref<2x64x32xbf16, #tpu.memory_space<vmem>>, %arg13: memref<2x1x32xf32, #tpu.memory_space<vmem>>, %arg14: memref<2x1x32xf32, #tpu.memory_space<vmem>>, %arg15: memref<2x1x32xf32, #tpu.memory_space<vmem>>, %arg16: memref<32x128xbf16, #tpu.memory_space<vmem>>, %arg17: memref<1x128xf32, #tpu.memory_space<vmem>>, %arg18: memref<16x128xf32, #tpu.memory_space<vmem>>) attributes {dimension_semantics = [], scalar_prefetch = 0 : i64, scratch_operands = 0 : i64, tpu.core_type = #tpu.core_type<tc>} {
    %c0 = arith.constant 0 : index
    %c0_0 = arith.constant 0 : index
    %0 = vector.load %arg0[%c0, %c0_0] : memref<16x32xf32, #tpu.memory_space<vmem>>, vector<16x32xf32>
    %c0_1 = arith.constant 0 : index
    %c0_2 = arith.constant 0 : index
    %1 = vector.load %arg2[%c0_1, %c0_2] : memref<1x32xf32, #tpu.memory_space<vmem>>, vector<1x32xf32>
    %c0_3 = arith.constant 0 : index
    %c0_4 = arith.constant 0 : index
    %2 = vector.load %arg3[%c0_3, %c0_4] : memref<1x32xf32, #tpu.memory_space<vmem>>, vector<1x32xf32>
    %cst = arith.constant dense<0.000000e+00> : vector<16xf32>
    %3 = vector.multi_reduction <add>, %0, %cst [1] : vector<16x32xf32> to vector<16xf32>
    %4 = vector.shape_cast %3 : vector<16xf32> to vector<16x1xf32>
    %cst_5 = arith.constant 3.200000e+01 : f32
    %5 = vector.broadcast %cst_5 : f32 to vector<16x1xf32>
    %6 = arith.divf %4, %5 : vector<16x1xf32>
    %7 = vector.broadcast %6 : vector<16x1xf32> to vector<16x32xf32>
    %8 = arith.subf %0, %7 : vector<16x32xf32>
    %9 = arith.mulf %8, %8 : vector<16x32xf32>
    %cst_6 = arith.constant dense<0.000000e+00> : vector<16xf32>
    %10 = vector.multi_reduction <add>, %9, %cst_6 [1] : vector<16x32xf32> to vector<16xf32>
    %11 = vector.shape_cast %10 : vector<16xf32> to vector<16x1xf32>
    %cst_7 = arith.constant 3.200000e+01 : f32
    %12 = vector.broadcast %cst_7 : f32 to vector<16x1xf32>
    %13 = arith.divf %11, %12 : vector<16x1xf32>
    %14 = vector.broadcast %6 : vector<16x1xf32> to vector<16x32xf32>
    %15 = arith.subf %0, %14 : vector<16x32xf32>
    %cst_8 = arith.constant 9.99999974E-6 : f32
    %16 = vector.broadcast %cst_8 : f32 to vector<16x1xf32>
    %17 = arith.addf %13, %16 : vector<16x1xf32>
    %18 = math.rsqrt %17 : vector<16x1xf32>
    %19 = vector.broadcast %18 : vector<16x1xf32> to vector<16x32xf32>
    %20 = arith.mulf %15, %19 : vector<16x32xf32>
    %21 = vector.broadcast %1 : vector<1x32xf32> to vector<16x32xf32>
    %22 = arith.mulf %20, %21 : vector<16x32xf32>
    %23 = vector.broadcast %2 : vector<1x32xf32> to vector<16x32xf32>
    %24 = arith.addf %22, %23 : vector<16x32xf32>
    %c0_9 = arith.constant 0 : index
    %c0_10 = arith.constant 0 : index
    %25 = vector.load %arg1[%c0_9, %c0_10] : memref<16x16xf32, #tpu.memory_space<vmem>>, vector<16x16xf32>
    %26 = arith.truncf %24 : vector<16x32xf32> to vector<16x32xbf16>
    %c0_11 = arith.constant 0 : index
    %c0_12 = arith.constant 0 : index
    %c0_13 = arith.constant 0 : index
    %27 = vector.load %arg4[%c0_11, %c0_12, %c0_13] : memref<2x32x96xbf16, #tpu.memory_space<vmem>>, vector<1x32x96xbf16>
    %28 = vector.shape_cast %27 : vector<1x32x96xbf16> to vector<32x96xbf16>
    %cst_14 = arith.constant dense<0.000000e+00> : vector<16x96xf32>
    %29 = tpu.matmul %26, %28, %cst_14 {dimension_numbers = #tpu.dot_dimension_numbers<[1], [0], [0], [1], [0, 0, 1, 1], [], []>} : vector<16x32xbf16>, vector<32x96xbf16>, vector<16x96xf32> -> vector<16x96xf32>
    %c0_15 = arith.constant 0 : index
    %c0_16 = arith.constant 0 : index
    %c0_17 = arith.constant 0 : index
    %30 = vector.load %arg5[%c0_15, %c0_16, %c0_17] : memref<2x1x96xf32, #tpu.memory_space<vmem>>, vector<1x1x96xf32>
    %31 = vector.shape_cast %30 : vector<1x1x96xf32> to vector<1x96xf32>
    %32 = vector.broadcast %31 : vector<1x96xf32> to vector<16x96xf32>
    %33 = arith.addf %29, %32 : vector<16x96xf32>
    %34 = vector.extract_strided_slice %33 {offsets = [0, 0], sizes = [16, 8], strides = [1, 1]} : vector<16x96xf32> to vector<16x8xf32>
    %35 = arith.truncf %34 : vector<16x8xf32> to vector<16x8xbf16>
    %36 = vector.extract_strided_slice %33 {offsets = [0, 32], sizes = [16, 8], strides = [1, 1]} : vector<16x96xf32> to vector<16x8xf32>
    %37 = arith.truncf %36 : vector<16x8xf32> to vector<16x8xbf16>
    %38 = vector.extract_strided_slice %33 {offsets = [0, 64], sizes = [16, 8], strides = [1, 1]} : vector<16x96xf32> to vector<16x8xf32>
    %39 = arith.truncf %38 : vector<16x8xf32> to vector<16x8xbf16>
    %40 = tpu.transpose %37, [1, 0] : vector<16x8xbf16> -> vector<8x16xbf16>
    %cst_18 = arith.constant dense<0.000000e+00> : vector<16x16xf32>
    %41 = tpu.matmul %35, %40, %cst_18 {dimension_numbers = #tpu.dot_dimension_numbers<[1], [0], [0], [1], [0, 0, 1, 1], [], []>} : vector<16x8xbf16>, vector<8x16xbf16>, vector<16x16xf32> -> vector<16x16xf32>
    %cst_19 = arith.constant 0.353553385 : f32
    %42 = vector.broadcast %cst_19 : f32 to vector<16x16xf32>
    %43 = arith.mulf %41, %42 : vector<16x16xf32>
    %44 = arith.addf %43, %25 : vector<16x16xf32>
    %cst_20 = arith.constant dense<0xFF800000> : vector<16xf32>
    %45 = vector.multi_reduction <maximumf>, %44, %cst_20 [1] : vector<16x16xf32> to vector<16xf32>
    %46 = vector.shape_cast %45 : vector<16xf32> to vector<16x1xf32>
    %47 = vector.broadcast %46 : vector<16x1xf32> to vector<16x16xf32>
    %48 = arith.subf %44, %47 : vector<16x16xf32>
    %49 = math.exp %48 : vector<16x16xf32>
    %cst_21 = arith.constant dense<0.000000e+00> : vector<16xf32>
    %50 = vector.multi_reduction <add>, %49, %cst_21 [1] : vector<16x16xf32> to vector<16xf32>
    %51 = vector.shape_cast %50 : vector<16xf32> to vector<16x1xf32>
    %52 = tpu.reciprocal %51 {approx = true} : vector<16x1xf32> -> vector<16x1xf32>
    %53 = vector.broadcast %52 : vector<16x1xf32> to vector<16x16xf32>
    %54 = arith.mulf %49, %53 : vector<16x16xf32>
    %55 = arith.truncf %54 : vector<16x16xf32> to vector<16x16xbf16>
    %cst_22 = arith.constant dense<0.000000e+00> : vector<16x8xf32>
    %56 = tpu.matmul %55, %39, %cst_22 {dimension_numbers = #tpu.dot_dimension_numbers<[1], [0], [0], [1], [0, 0, 1, 1], [], []>} : vector<16x16xbf16>, vector<16x8xbf16>, vector<16x8xf32> -> vector<16x8xf32>
    %57 = vector.extract_strided_slice %33 {offsets = [0, 8], sizes = [16, 8], strides = [1, 1]} : vector<16x96xf32> to vector<16x8xf32>
    %58 = arith.truncf %57 : vector<16x8xf32> to vector<16x8xbf16>
    %59 = vector.extract_strided_slice %33 {offsets = [0, 40], sizes = [16, 8], strides = [1, 1]} : vector<16x96xf32> to vector<16x8xf32>
    %60 = arith.truncf %59 : vector<16x8xf32> to vector<16x8xbf16>
    %61 = vector.extract_strided_slice %33 {offsets = [0, 72], sizes = [16, 8], strides = [1, 1]} : vector<16x96xf32> to vector<16x8xf32>
    %62 = arith.truncf %61 : vector<16x8xf32> to vector<16x8xbf16>
    %63 = tpu.transpose %60, [1, 0] : vector<16x8xbf16> -> vector<8x16xbf16>
    %cst_23 = arith.constant dense<0.000000e+00> : vector<16x16xf32>
    %64 = tpu.matmul %58, %63, %cst_23 {dimension_numbers = #tpu.dot_dimension_numbers<[1], [0], [0], [1], [0, 0, 1, 1], [], []>} : vector<16x8xbf16>, vector<8x16xbf16>, vector<16x16xf32> -> vector<16x16xf32>
    %cst_24 = arith.constant 0.353553385 : f32
    %65 = vector.broadcast %cst_24 : f32 to vector<16x16xf32>
    %66 = arith.mulf %64, %65 : vector<16x16xf32>
    %67 = arith.addf %66, %25 : vector<16x16xf32>
    %cst_25 = arith.constant dense<0xFF800000> : vector<16xf32>
    %68 = vector.multi_reduction <maximumf>, %67, %cst_25 [1] : vector<16x16xf32> to vector<16xf32>
    %69 = vector.shape_cast %68 : vector<16xf32> to vector<16x1xf32>
    %70 = vector.broadcast %69 : vector<16x1xf32> to vector<16x16xf32>
    %71 = arith.subf %67, %70 : vector<16x16xf32>
    %72 = math.exp %71 : vector<16x16xf32>
    %cst_26 = arith.constant dense<0.000000e+00> : vector<16xf32>
    %73 = vector.multi_reduction <add>, %72, %cst_26 [1] : vector<16x16xf32> to vector<16xf32>
    %74 = vector.shape_cast %73 : vector<16xf32> to vector<16x1xf32>
    %75 = tpu.reciprocal %74 {approx = true} : vector<16x1xf32> -> vector<16x1xf32>
    %76 = vector.broadcast %75 : vector<16x1xf32> to vector<16x16xf32>
    %77 = arith.mulf %72, %76 : vector<16x16xf32>
    %78 = arith.truncf %77 : vector<16x16xf32> to vector<16x16xbf16>
    %cst_27 = arith.constant dense<0.000000e+00> : vector<16x8xf32>
    %79 = tpu.matmul %78, %62, %cst_27 {dimension_numbers = #tpu.dot_dimension_numbers<[1], [0], [0], [1], [0, 0, 1, 1], [], []>} : vector<16x16xbf16>, vector<16x8xbf16>, vector<16x8xf32> -> vector<16x8xf32>
    %80 = vector.extract_strided_slice %33 {offsets = [0, 16], sizes = [16, 8], strides = [1, 1]} : vector<16x96xf32> to vector<16x8xf32>
    %81 = arith.truncf %80 : vector<16x8xf32> to vector<16x8xbf16>
    %82 = vector.extract_strided_slice %33 {offsets = [0, 48], sizes = [16, 8], strides = [1, 1]} : vector<16x96xf32> to vector<16x8xf32>
    %83 = arith.truncf %82 : vector<16x8xf32> to vector<16x8xbf16>
    %84 = vector.extract_strided_slice %33 {offsets = [0, 80], sizes = [16, 8], strides = [1, 1]} : vector<16x96xf32> to vector<16x8xf32>
    %85 = arith.truncf %84 : vector<16x8xf32> to vector<16x8xbf16>
    %86 = tpu.transpose %83, [1, 0] : vector<16x8xbf16> -> vector<8x16xbf16>
    %cst_28 = arith.constant dense<0.000000e+00> : vector<16x16xf32>
    %87 = tpu.matmul %81, %86, %cst_28 {dimension_numbers = #tpu.dot_dimension_numbers<[1], [0], [0], [1], [0, 0, 1, 1], [], []>} : vector<16x8xbf16>, vector<8x16xbf16>, vector<16x16xf32> -> vector<16x16xf32>
    %cst_29 = arith.constant 0.353553385 : f32
    %88 = vector.broadcast %cst_29 : f32 to vector<16x16xf32>
    %89 = arith.mulf %87, %88 : vector<16x16xf32>
    %90 = arith.addf %89, %25 : vector<16x16xf32>
    %cst_30 = arith.constant dense<0xFF800000> : vector<16xf32>
    %91 = vector.multi_reduction <maximumf>, %90, %cst_30 [1] : vector<16x16xf32> to vector<16xf32>
    %92 = vector.shape_cast %91 : vector<16xf32> to vector<16x1xf32>
    %93 = vector.broadcast %92 : vector<16x1xf32> to vector<16x16xf32>
    %94 = arith.subf %90, %93 : vector<16x16xf32>
    %95 = math.exp %94 : vector<16x16xf32>
    %cst_31 = arith.constant dense<0.000000e+00> : vector<16xf32>
    %96 = vector.multi_reduction <add>, %95, %cst_31 [1] : vector<16x16xf32> to vector<16xf32>
    %97 = vector.shape_cast %96 : vector<16xf32> to vector<16x1xf32>
    %98 = tpu.reciprocal %97 {approx = true} : vector<16x1xf32> -> vector<16x1xf32>
    %99 = vector.broadcast %98 : vector<16x1xf32> to vector<16x16xf32>
    %100 = arith.mulf %95, %99 : vector<16x16xf32>
    %101 = arith.truncf %100 : vector<16x16xf32> to vector<16x16xbf16>
    %cst_32 = arith.constant dense<0.000000e+00> : vector<16x8xf32>
    %102 = tpu.matmul %101, %85, %cst_32 {dimension_numbers = #tpu.dot_dimension_numbers<[1], [0], [0], [1], [0, 0, 1, 1], [], []>} : vector<16x16xbf16>, vector<16x8xbf16>, vector<16x8xf32> -> vector<16x8xf32>
    %103 = vector.extract_strided_slice %33 {offsets = [0, 24], sizes = [16, 8], strides = [1, 1]} : vector<16x96xf32> to vector<16x8xf32>
    %104 = arith.truncf %103 : vector<16x8xf32> to vector<16x8xbf16>
    %105 = vector.extract_strided_slice %33 {offsets = [0, 56], sizes = [16, 8], strides = [1, 1]} : vector<16x96xf32> to vector<16x8xf32>
    %106 = arith.truncf %105 : vector<16x8xf32> to vector<16x8xbf16>
    %107 = vector.extract_strided_slice %33 {offsets = [0, 88], sizes = [16, 8], strides = [1, 1]} : vector<16x96xf32> to vector<16x8xf32>
    %108 = arith.truncf %107 : vector<16x8xf32> to vector<16x8xbf16>
    %109 = tpu.transpose %106, [1, 0] : vector<16x8xbf16> -> vector<8x16xbf16>
    %cst_33 = arith.constant dense<0.000000e+00> : vector<16x16xf32>
    %110 = tpu.matmul %104, %109, %cst_33 {dimension_numbers = #tpu.dot_dimension_numbers<[1], [0], [0], [1], [0, 0, 1, 1], [], []>} : vector<16x8xbf16>, vector<8x16xbf16>, vector<16x16xf32> -> vector<16x16xf32>
    %cst_34 = arith.constant 0.353553385 : f32
    %111 = vector.broadcast %cst_34 : f32 to vector<16x16xf32>
    %112 = arith.mulf %110, %111 : vector<16x16xf32>
    %113 = arith.addf %112, %25 : vector<16x16xf32>
    %cst_35 = arith.constant dense<0xFF800000> : vector<16xf32>
    %114 = vector.multi_reduction <maximumf>, %113, %cst_35 [1] : vector<16x16xf32> to vector<16xf32>
    %115 = vector.shape_cast %114 : vector<16xf32> to vector<16x1xf32>
    %116 = vector.broadcast %115 : vector<16x1xf32> to vector<16x16xf32>
    %117 = arith.subf %113, %116 : vector<16x16xf32>
    %118 = math.exp %117 : vector<16x16xf32>
    %cst_36 = arith.constant dense<0.000000e+00> : vector<16xf32>
    %119 = vector.multi_reduction <add>, %118, %cst_36 [1] : vector<16x16xf32> to vector<16xf32>
    %120 = vector.shape_cast %119 : vector<16xf32> to vector<16x1xf32>
    %121 = tpu.reciprocal %120 {approx = true} : vector<16x1xf32> -> vector<16x1xf32>
    %122 = vector.broadcast %121 : vector<16x1xf32> to vector<16x16xf32>
    %123 = arith.mulf %118, %122 : vector<16x16xf32>
    %124 = arith.truncf %123 : vector<16x16xf32> to vector<16x16xbf16>
    %cst_37 = arith.constant dense<0.000000e+00> : vector<16x8xf32>
    %125 = tpu.matmul %124, %108, %cst_37 {dimension_numbers = #tpu.dot_dimension_numbers<[1], [0], [0], [1], [0, 0, 1, 1], [], []>} : vector<16x16xbf16>, vector<16x8xbf16>, vector<16x8xf32> -> vector<16x8xf32>
    %126 = tpu.concatenate %56, %79, %102, %125 in 1 : vector<16x8xf32>, vector<16x8xf32>, vector<16x8xf32>, vector<16x8xf32> -> vector<16x32xf32>
    %127 = arith.truncf %126 : vector<16x32xf32> to vector<16x32xbf16>
    %c0_38 = arith.constant 0 : index
    %c0_39 = arith.constant 0 : index
    %c0_40 = arith.constant 0 : index
    %128 = vector.load %arg6[%c0_38, %c0_39, %c0_40] : memref<2x32x32xbf16, #tpu.memory_space<vmem>>, vector<1x32x32xbf16>
    %129 = vector.shape_cast %128 : vector<1x32x32xbf16> to vector<32x32xbf16>
    %cst_41 = arith.constant dense<0.000000e+00> : vector<16x32xf32>
    %130 = tpu.matmul %127, %129, %cst_41 {dimension_numbers = #tpu.dot_dimension_numbers<[1], [0], [0], [1], [0, 0, 1, 1], [], []>} : vector<16x32xbf16>, vector<32x32xbf16>, vector<16x32xf32> -> vector<16x32xf32>
    %c0_42 = arith.constant 0 : index
    %c0_43 = arith.constant 0 : index
    %c0_44 = arith.constant 0 : index
    %131 = vector.load %arg7[%c0_42, %c0_43, %c0_44] : memref<2x1x32xf32, #tpu.memory_space<vmem>>, vector<1x1x32xf32>
    %132 = vector.shape_cast %131 : vector<1x1x32xf32> to vector<1x32xf32>
    %133 = vector.broadcast %132 : vector<1x32xf32> to vector<16x32xf32>
    %134 = arith.addf %130, %133 : vector<16x32xf32>
    %135 = arith.addf %24, %134 : vector<16x32xf32>
    %c0_45 = arith.constant 0 : index
    %c0_46 = arith.constant 0 : index
    %c0_47 = arith.constant 0 : index
    %136 = vector.load %arg8[%c0_45, %c0_46, %c0_47] : memref<2x1x32xf32, #tpu.memory_space<vmem>>, vector<1x1x32xf32>
    %137 = vector.shape_cast %136 : vector<1x1x32xf32> to vector<1x32xf32>
    %c0_48 = arith.constant 0 : index
    %c0_49 = arith.constant 0 : index
    %c0_50 = arith.constant 0 : index
    %138 = vector.load %arg9[%c0_48, %c0_49, %c0_50] : memref<2x1x32xf32, #tpu.memory_space<vmem>>, vector<1x1x32xf32>
    %139 = vector.shape_cast %138 : vector<1x1x32xf32> to vector<1x32xf32>
    %cst_51 = arith.constant dense<0.000000e+00> : vector<16xf32>
    %140 = vector.multi_reduction <add>, %135, %cst_51 [1] : vector<16x32xf32> to vector<16xf32>
    %141 = vector.shape_cast %140 : vector<16xf32> to vector<16x1xf32>
    %cst_52 = arith.constant 3.200000e+01 : f32
    %142 = vector.broadcast %cst_52 : f32 to vector<16x1xf32>
    %143 = arith.divf %141, %142 : vector<16x1xf32>
    %144 = vector.broadcast %143 : vector<16x1xf32> to vector<16x32xf32>
    %145 = arith.subf %135, %144 : vector<16x32xf32>
    %146 = arith.mulf %145, %145 : vector<16x32xf32>
    %cst_53 = arith.constant dense<0.000000e+00> : vector<16xf32>
    %147 = vector.multi_reduction <add>, %146, %cst_53 [1] : vector<16x32xf32> to vector<16xf32>
    %148 = vector.shape_cast %147 : vector<16xf32> to vector<16x1xf32>
    %cst_54 = arith.constant 3.200000e+01 : f32
    %149 = vector.broadcast %cst_54 : f32 to vector<16x1xf32>
    %150 = arith.divf %148, %149 : vector<16x1xf32>
    %151 = vector.broadcast %143 : vector<16x1xf32> to vector<16x32xf32>
    %152 = arith.subf %135, %151 : vector<16x32xf32>
    %cst_55 = arith.constant 9.99999974E-6 : f32
    %153 = vector.broadcast %cst_55 : f32 to vector<16x1xf32>
    %154 = arith.addf %150, %153 : vector<16x1xf32>
    %155 = math.rsqrt %154 : vector<16x1xf32>
    %156 = vector.broadcast %155 : vector<16x1xf32> to vector<16x32xf32>
    %157 = arith.mulf %152, %156 : vector<16x32xf32>
    %158 = vector.broadcast %137 : vector<1x32xf32> to vector<16x32xf32>
    %159 = arith.mulf %157, %158 : vector<16x32xf32>
    %160 = vector.broadcast %139 : vector<1x32xf32> to vector<16x32xf32>
    %161 = arith.addf %159, %160 : vector<16x32xf32>
    %162 = arith.truncf %161 : vector<16x32xf32> to vector<16x32xbf16>
    %c0_56 = arith.constant 0 : index
    %c0_57 = arith.constant 0 : index
    %c0_58 = arith.constant 0 : index
    %163 = vector.load %arg10[%c0_56, %c0_57, %c0_58] : memref<2x32x64xbf16, #tpu.memory_space<vmem>>, vector<1x32x64xbf16>
    %164 = vector.shape_cast %163 : vector<1x32x64xbf16> to vector<32x64xbf16>
    %cst_59 = arith.constant dense<0.000000e+00> : vector<16x64xf32>
    %165 = tpu.matmul %162, %164, %cst_59 {dimension_numbers = #tpu.dot_dimension_numbers<[1], [0], [0], [1], [0, 0, 1, 1], [], []>} : vector<16x32xbf16>, vector<32x64xbf16>, vector<16x64xf32> -> vector<16x64xf32>
    %c0_60 = arith.constant 0 : index
    %c0_61 = arith.constant 0 : index
    %c0_62 = arith.constant 0 : index
    %166 = vector.load %arg11[%c0_60, %c0_61, %c0_62] : memref<2x1x64xf32, #tpu.memory_space<vmem>>, vector<1x1x64xf32>
    %167 = vector.shape_cast %166 : vector<1x1x64xf32> to vector<1x64xf32>
    %168 = vector.broadcast %167 : vector<1x64xf32> to vector<16x64xf32>
    %169 = arith.addf %165, %168 : vector<16x64xf32>
    %170 = arith.mulf %169, %169 : vector<16x64xf32>
    %171 = arith.mulf %169, %170 : vector<16x64xf32>
    %cst_63 = arith.constant 4.471500e-02 : f32
    %172 = vector.broadcast %cst_63 : f32 to vector<16x64xf32>
    %173 = arith.mulf %172, %171 : vector<16x64xf32>
    %174 = arith.addf %169, %173 : vector<16x64xf32>
    %cst_64 = arith.constant 0.797884583 : f32
    %175 = vector.broadcast %cst_64 : f32 to vector<16x64xf32>
    %176 = arith.mulf %175, %174 : vector<16x64xf32>
    %177 = math.tanh %176 : vector<16x64xf32>
    %cst_65 = arith.constant 1.000000e+00 : f32
    %178 = vector.broadcast %cst_65 : f32 to vector<16x64xf32>
    %179 = arith.addf %178, %177 : vector<16x64xf32>
    %cst_66 = arith.constant 5.000000e-01 : f32
    %180 = vector.broadcast %cst_66 : f32 to vector<16x64xf32>
    %181 = arith.mulf %180, %179 : vector<16x64xf32>
    %182 = arith.mulf %169, %181 : vector<16x64xf32>
    %183 = arith.truncf %182 : vector<16x64xf32> to vector<16x64xbf16>
    %c0_67 = arith.constant 0 : index
    %c0_68 = arith.constant 0 : index
    %c0_69 = arith.constant 0 : index
    %184 = vector.load %arg12[%c0_67, %c0_68, %c0_69] : memref<2x64x32xbf16, #tpu.memory_space<vmem>>, vector<1x64x32xbf16>
    %185 = vector.shape_cast %184 : vector<1x64x32xbf16> to vector<64x32xbf16>
    %cst_70 = arith.constant dense<0.000000e+00> : vector<16x32xf32>
    %186 = tpu.matmul %183, %185, %cst_70 {dimension_numbers = #tpu.dot_dimension_numbers<[1], [0], [0], [1], [0, 0, 1, 1], [], []>} : vector<16x64xbf16>, vector<64x32xbf16>, vector<16x32xf32> -> vector<16x32xf32>
    %c0_71 = arith.constant 0 : index
    %c0_72 = arith.constant 0 : index
    %c0_73 = arith.constant 0 : index
    %187 = vector.load %arg13[%c0_71, %c0_72, %c0_73] : memref<2x1x32xf32, #tpu.memory_space<vmem>>, vector<1x1x32xf32>
    %188 = vector.shape_cast %187 : vector<1x1x32xf32> to vector<1x32xf32>
    %189 = vector.broadcast %188 : vector<1x32xf32> to vector<16x32xf32>
    %190 = arith.addf %186, %189 : vector<16x32xf32>
    %191 = arith.addf %161, %190 : vector<16x32xf32>
    %c0_74 = arith.constant 0 : index
    %c0_75 = arith.constant 0 : index
    %c0_76 = arith.constant 0 : index
    %192 = vector.load %arg14[%c0_74, %c0_75, %c0_76] : memref<2x1x32xf32, #tpu.memory_space<vmem>>, vector<1x1x32xf32>
    %193 = vector.shape_cast %192 : vector<1x1x32xf32> to vector<1x32xf32>
    %c0_77 = arith.constant 0 : index
    %c0_78 = arith.constant 0 : index
    %c0_79 = arith.constant 0 : index
    %194 = vector.load %arg15[%c0_77, %c0_78, %c0_79] : memref<2x1x32xf32, #tpu.memory_space<vmem>>, vector<1x1x32xf32>
    %195 = vector.shape_cast %194 : vector<1x1x32xf32> to vector<1x32xf32>
    %cst_80 = arith.constant dense<0.000000e+00> : vector<16xf32>
    %196 = vector.multi_reduction <add>, %191, %cst_80 [1] : vector<16x32xf32> to vector<16xf32>
    %197 = vector.shape_cast %196 : vector<16xf32> to vector<16x1xf32>
    %cst_81 = arith.constant 3.200000e+01 : f32
    %198 = vector.broadcast %cst_81 : f32 to vector<16x1xf32>
    %199 = arith.divf %197, %198 : vector<16x1xf32>
    %200 = vector.broadcast %199 : vector<16x1xf32> to vector<16x32xf32>
    %201 = arith.subf %191, %200 : vector<16x32xf32>
    %202 = arith.mulf %201, %201 : vector<16x32xf32>
    %cst_82 = arith.constant dense<0.000000e+00> : vector<16xf32>
    %203 = vector.multi_reduction <add>, %202, %cst_82 [1] : vector<16x32xf32> to vector<16xf32>
    %204 = vector.shape_cast %203 : vector<16xf32> to vector<16x1xf32>
    %cst_83 = arith.constant 3.200000e+01 : f32
    %205 = vector.broadcast %cst_83 : f32 to vector<16x1xf32>
    %206 = arith.divf %204, %205 : vector<16x1xf32>
    %207 = vector.broadcast %199 : vector<16x1xf32> to vector<16x32xf32>
    %208 = arith.subf %191, %207 : vector<16x32xf32>
    %cst_84 = arith.constant 9.99999974E-6 : f32
    %209 = vector.broadcast %cst_84 : f32 to vector<16x1xf32>
    %210 = arith.addf %206, %209 : vector<16x1xf32>
    %211 = math.rsqrt %210 : vector<16x1xf32>
    %212 = vector.broadcast %211 : vector<16x1xf32> to vector<16x32xf32>
    %213 = arith.mulf %208, %212 : vector<16x32xf32>
    %214 = vector.broadcast %193 : vector<1x32xf32> to vector<16x32xf32>
    %215 = arith.mulf %213, %214 : vector<16x32xf32>
    %216 = vector.broadcast %195 : vector<1x32xf32> to vector<16x32xf32>
    %217 = arith.addf %215, %216 : vector<16x32xf32>
    %218 = arith.truncf %217 : vector<16x32xf32> to vector<16x32xbf16>
    %c1 = arith.constant 1 : index
    %c0_85 = arith.constant 0 : index
    %c0_86 = arith.constant 0 : index
    %219 = vector.load %arg4[%c1, %c0_85, %c0_86] : memref<2x32x96xbf16, #tpu.memory_space<vmem>>, vector<1x32x96xbf16>
    %220 = vector.shape_cast %219 : vector<1x32x96xbf16> to vector<32x96xbf16>
    %cst_87 = arith.constant dense<0.000000e+00> : vector<16x96xf32>
    %221 = tpu.matmul %218, %220, %cst_87 {dimension_numbers = #tpu.dot_dimension_numbers<[1], [0], [0], [1], [0, 0, 1, 1], [], []>} : vector<16x32xbf16>, vector<32x96xbf16>, vector<16x96xf32> -> vector<16x96xf32>
    %c1_88 = arith.constant 1 : index
    %c0_89 = arith.constant 0 : index
    %c0_90 = arith.constant 0 : index
    %222 = vector.load %arg5[%c1_88, %c0_89, %c0_90] : memref<2x1x96xf32, #tpu.memory_space<vmem>>, vector<1x1x96xf32>
    %223 = vector.shape_cast %222 : vector<1x1x96xf32> to vector<1x96xf32>
    %224 = vector.broadcast %223 : vector<1x96xf32> to vector<16x96xf32>
    %225 = arith.addf %221, %224 : vector<16x96xf32>
    %226 = vector.extract_strided_slice %225 {offsets = [0, 0], sizes = [16, 8], strides = [1, 1]} : vector<16x96xf32> to vector<16x8xf32>
    %227 = arith.truncf %226 : vector<16x8xf32> to vector<16x8xbf16>
    %228 = vector.extract_strided_slice %225 {offsets = [0, 32], sizes = [16, 8], strides = [1, 1]} : vector<16x96xf32> to vector<16x8xf32>
    %229 = arith.truncf %228 : vector<16x8xf32> to vector<16x8xbf16>
    %230 = vector.extract_strided_slice %225 {offsets = [0, 64], sizes = [16, 8], strides = [1, 1]} : vector<16x96xf32> to vector<16x8xf32>
    %231 = arith.truncf %230 : vector<16x8xf32> to vector<16x8xbf16>
    %232 = tpu.transpose %229, [1, 0] : vector<16x8xbf16> -> vector<8x16xbf16>
    %cst_91 = arith.constant dense<0.000000e+00> : vector<16x16xf32>
    %233 = tpu.matmul %227, %232, %cst_91 {dimension_numbers = #tpu.dot_dimension_numbers<[1], [0], [0], [1], [0, 0, 1, 1], [], []>} : vector<16x8xbf16>, vector<8x16xbf16>, vector<16x16xf32> -> vector<16x16xf32>
    %cst_92 = arith.constant 0.353553385 : f32
    %234 = vector.broadcast %cst_92 : f32 to vector<16x16xf32>
    %235 = arith.mulf %233, %234 : vector<16x16xf32>
    %236 = arith.addf %235, %25 : vector<16x16xf32>
    %cst_93 = arith.constant dense<0xFF800000> : vector<16xf32>
    %237 = vector.multi_reduction <maximumf>, %236, %cst_93 [1] : vector<16x16xf32> to vector<16xf32>
    %238 = vector.shape_cast %237 : vector<16xf32> to vector<16x1xf32>
    %239 = vector.broadcast %238 : vector<16x1xf32> to vector<16x16xf32>
    %240 = arith.subf %236, %239 : vector<16x16xf32>
    %241 = math.exp %240 : vector<16x16xf32>
    %cst_94 = arith.constant dense<0.000000e+00> : vector<16xf32>
    %242 = vector.multi_reduction <add>, %241, %cst_94 [1] : vector<16x16xf32> to vector<16xf32>
    %243 = vector.shape_cast %242 : vector<16xf32> to vector<16x1xf32>
    %244 = tpu.reciprocal %243 {approx = true} : vector<16x1xf32> -> vector<16x1xf32>
    %245 = vector.broadcast %244 : vector<16x1xf32> to vector<16x16xf32>
    %246 = arith.mulf %241, %245 : vector<16x16xf32>
    %247 = arith.truncf %246 : vector<16x16xf32> to vector<16x16xbf16>
    %cst_95 = arith.constant dense<0.000000e+00> : vector<16x8xf32>
    %248 = tpu.matmul %247, %231, %cst_95 {dimension_numbers = #tpu.dot_dimension_numbers<[1], [0], [0], [1], [0, 0, 1, 1], [], []>} : vector<16x16xbf16>, vector<16x8xbf16>, vector<16x8xf32> -> vector<16x8xf32>
    %249 = vector.extract_strided_slice %225 {offsets = [0, 8], sizes = [16, 8], strides = [1, 1]} : vector<16x96xf32> to vector<16x8xf32>
    %250 = arith.truncf %249 : vector<16x8xf32> to vector<16x8xbf16>
    %251 = vector.extract_strided_slice %225 {offsets = [0, 40], sizes = [16, 8], strides = [1, 1]} : vector<16x96xf32> to vector<16x8xf32>
    %252 = arith.truncf %251 : vector<16x8xf32> to vector<16x8xbf16>
    %253 = vector.extract_strided_slice %225 {offsets = [0, 72], sizes = [16, 8], strides = [1, 1]} : vector<16x96xf32> to vector<16x8xf32>
    %254 = arith.truncf %253 : vector<16x8xf32> to vector<16x8xbf16>
    %255 = tpu.transpose %252, [1, 0] : vector<16x8xbf16> -> vector<8x16xbf16>
    %cst_96 = arith.constant dense<0.000000e+00> : vector<16x16xf32>
    %256 = tpu.matmul %250, %255, %cst_96 {dimension_numbers = #tpu.dot_dimension_numbers<[1], [0], [0], [1], [0, 0, 1, 1], [], []>} : vector<16x8xbf16>, vector<8x16xbf16>, vector<16x16xf32> -> vector<16x16xf32>
    %cst_97 = arith.constant 0.353553385 : f32
    %257 = vector.broadcast %cst_97 : f32 to vector<16x16xf32>
    %258 = arith.mulf %256, %257 : vector<16x16xf32>
    %259 = arith.addf %258, %25 : vector<16x16xf32>
    %cst_98 = arith.constant dense<0xFF800000> : vector<16xf32>
    %260 = vector.multi_reduction <maximumf>, %259, %cst_98 [1] : vector<16x16xf32> to vector<16xf32>
    %261 = vector.shape_cast %260 : vector<16xf32> to vector<16x1xf32>
    %262 = vector.broadcast %261 : vector<16x1xf32> to vector<16x16xf32>
    %263 = arith.subf %259, %262 : vector<16x16xf32>
    %264 = math.exp %263 : vector<16x16xf32>
    %cst_99 = arith.constant dense<0.000000e+00> : vector<16xf32>
    %265 = vector.multi_reduction <add>, %264, %cst_99 [1] : vector<16x16xf32> to vector<16xf32>
    %266 = vector.shape_cast %265 : vector<16xf32> to vector<16x1xf32>
    %267 = tpu.reciprocal %266 {approx = true} : vector<16x1xf32> -> vector<16x1xf32>
    %268 = vector.broadcast %267 : vector<16x1xf32> to vector<16x16xf32>
    %269 = arith.mulf %264, %268 : vector<16x16xf32>
    %270 = arith.truncf %269 : vector<16x16xf32> to vector<16x16xbf16>
    %cst_100 = arith.constant dense<0.000000e+00> : vector<16x8xf32>
    %271 = tpu.matmul %270, %254, %cst_100 {dimension_numbers = #tpu.dot_dimension_numbers<[1], [0], [0], [1], [0, 0, 1, 1], [], []>} : vector<16x16xbf16>, vector<16x8xbf16>, vector<16x8xf32> -> vector<16x8xf32>
    %272 = vector.extract_strided_slice %225 {offsets = [0, 16], sizes = [16, 8], strides = [1, 1]} : vector<16x96xf32> to vector<16x8xf32>
    %273 = arith.truncf %272 : vector<16x8xf32> to vector<16x8xbf16>
    %274 = vector.extract_strided_slice %225 {offsets = [0, 48], sizes = [16, 8], strides = [1, 1]} : vector<16x96xf32> to vector<16x8xf32>
    %275 = arith.truncf %274 : vector<16x8xf32> to vector<16x8xbf16>
    %276 = vector.extract_strided_slice %225 {offsets = [0, 80], sizes = [16, 8], strides = [1, 1]} : vector<16x96xf32> to vector<16x8xf32>
    %277 = arith.truncf %276 : vector<16x8xf32> to vector<16x8xbf16>
    %278 = tpu.transpose %275, [1, 0] : vector<16x8xbf16> -> vector<8x16xbf16>
    %cst_101 = arith.constant dense<0.000000e+00> : vector<16x16xf32>
    %279 = tpu.matmul %273, %278, %cst_101 {dimension_numbers = #tpu.dot_dimension_numbers<[1], [0], [0], [1], [0, 0, 1, 1], [], []>} : vector<16x8xbf16>, vector<8x16xbf16>, vector<16x16xf32> -> vector<16x16xf32>
    %cst_102 = arith.constant 0.353553385 : f32
    %280 = vector.broadcast %cst_102 : f32 to vector<16x16xf32>
    %281 = arith.mulf %279, %280 : vector<16x16xf32>
    %282 = arith.addf %281, %25 : vector<16x16xf32>
    %cst_103 = arith.constant dense<0xFF800000> : vector<16xf32>
    %283 = vector.multi_reduction <maximumf>, %282, %cst_103 [1] : vector<16x16xf32> to vector<16xf32>
    %284 = vector.shape_cast %283 : vector<16xf32> to vector<16x1xf32>
    %285 = vector.broadcast %284 : vector<16x1xf32> to vector<16x16xf32>
    %286 = arith.subf %282, %285 : vector<16x16xf32>
    %287 = math.exp %286 : vector<16x16xf32>
    %cst_104 = arith.constant dense<0.000000e+00> : vector<16xf32>
    %288 = vector.multi_reduction <add>, %287, %cst_104 [1] : vector<16x16xf32> to vector<16xf32>
    %289 = vector.shape_cast %288 : vector<16xf32> to vector<16x1xf32>
    %290 = tpu.reciprocal %289 {approx = true} : vector<16x1xf32> -> vector<16x1xf32>
    %291 = vector.broadcast %290 : vector<16x1xf32> to vector<16x16xf32>
    %292 = arith.mulf %287, %291 : vector<16x16xf32>
    %293 = arith.truncf %292 : vector<16x16xf32> to vector<16x16xbf16>
    %cst_105 = arith.constant dense<0.000000e+00> : vector<16x8xf32>
    %294 = tpu.matmul %293, %277, %cst_105 {dimension_numbers = #tpu.dot_dimension_numbers<[1], [0], [0], [1], [0, 0, 1, 1], [], []>} : vector<16x16xbf16>, vector<16x8xbf16>, vector<16x8xf32> -> vector<16x8xf32>
    %295 = vector.extract_strided_slice %225 {offsets = [0, 24], sizes = [16, 8], strides = [1, 1]} : vector<16x96xf32> to vector<16x8xf32>
    %296 = arith.truncf %295 : vector<16x8xf32> to vector<16x8xbf16>
    %297 = vector.extract_strided_slice %225 {offsets = [0, 56], sizes = [16, 8], strides = [1, 1]} : vector<16x96xf32> to vector<16x8xf32>
    %298 = arith.truncf %297 : vector<16x8xf32> to vector<16x8xbf16>
    %299 = vector.extract_strided_slice %225 {offsets = [0, 88], sizes = [16, 8], strides = [1, 1]} : vector<16x96xf32> to vector<16x8xf32>
    %300 = arith.truncf %299 : vector<16x8xf32> to vector<16x8xbf16>
    %301 = tpu.transpose %298, [1, 0] : vector<16x8xbf16> -> vector<8x16xbf16>
    %cst_106 = arith.constant dense<0.000000e+00> : vector<16x16xf32>
    %302 = tpu.matmul %296, %301, %cst_106 {dimension_numbers = #tpu.dot_dimension_numbers<[1], [0], [0], [1], [0, 0, 1, 1], [], []>} : vector<16x8xbf16>, vector<8x16xbf16>, vector<16x16xf32> -> vector<16x16xf32>
    %cst_107 = arith.constant 0.353553385 : f32
    %303 = vector.broadcast %cst_107 : f32 to vector<16x16xf32>
    %304 = arith.mulf %302, %303 : vector<16x16xf32>
    %305 = arith.addf %304, %25 : vector<16x16xf32>
    %cst_108 = arith.constant dense<0xFF800000> : vector<16xf32>
    %306 = vector.multi_reduction <maximumf>, %305, %cst_108 [1] : vector<16x16xf32> to vector<16xf32>
    %307 = vector.shape_cast %306 : vector<16xf32> to vector<16x1xf32>
    %308 = vector.broadcast %307 : vector<16x1xf32> to vector<16x16xf32>
    %309 = arith.subf %305, %308 : vector<16x16xf32>
    %310 = math.exp %309 : vector<16x16xf32>
    %cst_109 = arith.constant dense<0.000000e+00> : vector<16xf32>
    %311 = vector.multi_reduction <add>, %310, %cst_109 [1] : vector<16x16xf32> to vector<16xf32>
    %312 = vector.shape_cast %311 : vector<16xf32> to vector<16x1xf32>
    %313 = tpu.reciprocal %312 {approx = true} : vector<16x1xf32> -> vector<16x1xf32>
    %314 = vector.broadcast %313 : vector<16x1xf32> to vector<16x16xf32>
    %315 = arith.mulf %310, %314 : vector<16x16xf32>
    %316 = arith.truncf %315 : vector<16x16xf32> to vector<16x16xbf16>
    %cst_110 = arith.constant dense<0.000000e+00> : vector<16x8xf32>
    %317 = tpu.matmul %316, %300, %cst_110 {dimension_numbers = #tpu.dot_dimension_numbers<[1], [0], [0], [1], [0, 0, 1, 1], [], []>} : vector<16x16xbf16>, vector<16x8xbf16>, vector<16x8xf32> -> vector<16x8xf32>
    %318 = tpu.concatenate %248, %271, %294, %317 in 1 : vector<16x8xf32>, vector<16x8xf32>, vector<16x8xf32>, vector<16x8xf32> -> vector<16x32xf32>
    %319 = arith.truncf %318 : vector<16x32xf32> to vector<16x32xbf16>
    %c1_111 = arith.constant 1 : index
    %c0_112 = arith.constant 0 : index
    %c0_113 = arith.constant 0 : index
    %320 = vector.load %arg6[%c1_111, %c0_112, %c0_113] : memref<2x32x32xbf16, #tpu.memory_space<vmem>>, vector<1x32x32xbf16>
    %321 = vector.shape_cast %320 : vector<1x32x32xbf16> to vector<32x32xbf16>
    %cst_114 = arith.constant dense<0.000000e+00> : vector<16x32xf32>
    %322 = tpu.matmul %319, %321, %cst_114 {dimension_numbers = #tpu.dot_dimension_numbers<[1], [0], [0], [1], [0, 0, 1, 1], [], []>} : vector<16x32xbf16>, vector<32x32xbf16>, vector<16x32xf32> -> vector<16x32xf32>
    %c1_115 = arith.constant 1 : index
    %c0_116 = arith.constant 0 : index
    %c0_117 = arith.constant 0 : index
    %323 = vector.load %arg7[%c1_115, %c0_116, %c0_117] : memref<2x1x32xf32, #tpu.memory_space<vmem>>, vector<1x1x32xf32>
    %324 = vector.shape_cast %323 : vector<1x1x32xf32> to vector<1x32xf32>
    %325 = vector.broadcast %324 : vector<1x32xf32> to vector<16x32xf32>
    %326 = arith.addf %322, %325 : vector<16x32xf32>
    %327 = arith.addf %217, %326 : vector<16x32xf32>
    %c1_118 = arith.constant 1 : index
    %c0_119 = arith.constant 0 : index
    %c0_120 = arith.constant 0 : index
    %328 = vector.load %arg8[%c1_118, %c0_119, %c0_120] : memref<2x1x32xf32, #tpu.memory_space<vmem>>, vector<1x1x32xf32>
    %329 = vector.shape_cast %328 : vector<1x1x32xf32> to vector<1x32xf32>
    %c1_121 = arith.constant 1 : index
    %c0_122 = arith.constant 0 : index
    %c0_123 = arith.constant 0 : index
    %330 = vector.load %arg9[%c1_121, %c0_122, %c0_123] : memref<2x1x32xf32, #tpu.memory_space<vmem>>, vector<1x1x32xf32>
    %331 = vector.shape_cast %330 : vector<1x1x32xf32> to vector<1x32xf32>
    %cst_124 = arith.constant dense<0.000000e+00> : vector<16xf32>
    %332 = vector.multi_reduction <add>, %327, %cst_124 [1] : vector<16x32xf32> to vector<16xf32>
    %333 = vector.shape_cast %332 : vector<16xf32> to vector<16x1xf32>
    %cst_125 = arith.constant 3.200000e+01 : f32
    %334 = vector.broadcast %cst_125 : f32 to vector<16x1xf32>
    %335 = arith.divf %333, %334 : vector<16x1xf32>
    %336 = vector.broadcast %335 : vector<16x1xf32> to vector<16x32xf32>
    %337 = arith.subf %327, %336 : vector<16x32xf32>
    %338 = arith.mulf %337, %337 : vector<16x32xf32>
    %cst_126 = arith.constant dense<0.000000e+00> : vector<16xf32>
    %339 = vector.multi_reduction <add>, %338, %cst_126 [1] : vector<16x32xf32> to vector<16xf32>
    %340 = vector.shape_cast %339 : vector<16xf32> to vector<16x1xf32>
    %cst_127 = arith.constant 3.200000e+01 : f32
    %341 = vector.broadcast %cst_127 : f32 to vector<16x1xf32>
    %342 = arith.divf %340, %341 : vector<16x1xf32>
    %343 = vector.broadcast %335 : vector<16x1xf32> to vector<16x32xf32>
    %344 = arith.subf %327, %343 : vector<16x32xf32>
    %cst_128 = arith.constant 9.99999974E-6 : f32
    %345 = vector.broadcast %cst_128 : f32 to vector<16x1xf32>
    %346 = arith.addf %342, %345 : vector<16x1xf32>
    %347 = math.rsqrt %346 : vector<16x1xf32>
    %348 = vector.broadcast %347 : vector<16x1xf32> to vector<16x32xf32>
    %349 = arith.mulf %344, %348 : vector<16x32xf32>
    %350 = vector.broadcast %329 : vector<1x32xf32> to vector<16x32xf32>
    %351 = arith.mulf %349, %350 : vector<16x32xf32>
    %352 = vector.broadcast %331 : vector<1x32xf32> to vector<16x32xf32>
    %353 = arith.addf %351, %352 : vector<16x32xf32>
    %354 = arith.truncf %353 : vector<16x32xf32> to vector<16x32xbf16>
    %c1_129 = arith.constant 1 : index
    %c0_130 = arith.constant 0 : index
    %c0_131 = arith.constant 0 : index
    %355 = vector.load %arg10[%c1_129, %c0_130, %c0_131] : memref<2x32x64xbf16, #tpu.memory_space<vmem>>, vector<1x32x64xbf16>
    %356 = vector.shape_cast %355 : vector<1x32x64xbf16> to vector<32x64xbf16>
    %cst_132 = arith.constant dense<0.000000e+00> : vector<16x64xf32>
    %357 = tpu.matmul %354, %356, %cst_132 {dimension_numbers = #tpu.dot_dimension_numbers<[1], [0], [0], [1], [0, 0, 1, 1], [], []>} : vector<16x32xbf16>, vector<32x64xbf16>, vector<16x64xf32> -> vector<16x64xf32>
    %c1_133 = arith.constant 1 : index
    %c0_134 = arith.constant 0 : index
    %c0_135 = arith.constant 0 : index
    %358 = vector.load %arg11[%c1_133, %c0_134, %c0_135] : memref<2x1x64xf32, #tpu.memory_space<vmem>>, vector<1x1x64xf32>
    %359 = vector.shape_cast %358 : vector<1x1x64xf32> to vector<1x64xf32>
    %360 = vector.broadcast %359 : vector<1x64xf32> to vector<16x64xf32>
    %361 = arith.addf %357, %360 : vector<16x64xf32>
    %362 = arith.mulf %361, %361 : vector<16x64xf32>
    %363 = arith.mulf %361, %362 : vector<16x64xf32>
    %cst_136 = arith.constant 4.471500e-02 : f32
    %364 = vector.broadcast %cst_136 : f32 to vector<16x64xf32>
    %365 = arith.mulf %364, %363 : vector<16x64xf32>
    %366 = arith.addf %361, %365 : vector<16x64xf32>
    %cst_137 = arith.constant 0.797884583 : f32
    %367 = vector.broadcast %cst_137 : f32 to vector<16x64xf32>
    %368 = arith.mulf %367, %366 : vector<16x64xf32>
    %369 = math.tanh %368 : vector<16x64xf32>
    %cst_138 = arith.constant 1.000000e+00 : f32
    %370 = vector.broadcast %cst_138 : f32 to vector<16x64xf32>
    %371 = arith.addf %370, %369 : vector<16x64xf32>
    %cst_139 = arith.constant 5.000000e-01 : f32
    %372 = vector.broadcast %cst_139 : f32 to vector<16x64xf32>
    %373 = arith.mulf %372, %371 : vector<16x64xf32>
    %374 = arith.mulf %361, %373 : vector<16x64xf32>
    %375 = arith.truncf %374 : vector<16x64xf32> to vector<16x64xbf16>
    %c1_140 = arith.constant 1 : index
    %c0_141 = arith.constant 0 : index
    %c0_142 = arith.constant 0 : index
    %376 = vector.load %arg12[%c1_140, %c0_141, %c0_142] : memref<2x64x32xbf16, #tpu.memory_space<vmem>>, vector<1x64x32xbf16>
    %377 = vector.shape_cast %376 : vector<1x64x32xbf16> to vector<64x32xbf16>
    %cst_143 = arith.constant dense<0.000000e+00> : vector<16x32xf32>
    %378 = tpu.matmul %375, %377, %cst_143 {dimension_numbers = #tpu.dot_dimension_numbers<[1], [0], [0], [1], [0, 0, 1, 1], [], []>} : vector<16x64xbf16>, vector<64x32xbf16>, vector<16x32xf32> -> vector<16x32xf32>
    %c1_144 = arith.constant 1 : index
    %c0_145 = arith.constant 0 : index
    %c0_146 = arith.constant 0 : index
    %379 = vector.load %arg13[%c1_144, %c0_145, %c0_146] : memref<2x1x32xf32, #tpu.memory_space<vmem>>, vector<1x1x32xf32>
    %380 = vector.shape_cast %379 : vector<1x1x32xf32> to vector<1x32xf32>
    %381 = vector.broadcast %380 : vector<1x32xf32> to vector<16x32xf32>
    %382 = arith.addf %378, %381 : vector<16x32xf32>
    %383 = arith.addf %353, %382 : vector<16x32xf32>
    %c1_147 = arith.constant 1 : index
    %c0_148 = arith.constant 0 : index
    %c0_149 = arith.constant 0 : index
    %384 = vector.load %arg14[%c1_147, %c0_148, %c0_149] : memref<2x1x32xf32, #tpu.memory_space<vmem>>, vector<1x1x32xf32>
    %385 = vector.shape_cast %384 : vector<1x1x32xf32> to vector<1x32xf32>
    %c1_150 = arith.constant 1 : index
    %c0_151 = arith.constant 0 : index
    %c0_152 = arith.constant 0 : index
    %386 = vector.load %arg15[%c1_150, %c0_151, %c0_152] : memref<2x1x32xf32, #tpu.memory_space<vmem>>, vector<1x1x32xf32>
    %387 = vector.shape_cast %386 : vector<1x1x32xf32> to vector<1x32xf32>
    %cst_153 = arith.constant dense<0.000000e+00> : vector<16xf32>
    %388 = vector.multi_reduction <add>, %383, %cst_153 [1] : vector<16x32xf32> to vector<16xf32>
    %389 = vector.shape_cast %388 : vector<16xf32> to vector<16x1xf32>
    %cst_154 = arith.constant 3.200000e+01 : f32
    %390 = vector.broadcast %cst_154 : f32 to vector<16x1xf32>
    %391 = arith.divf %389, %390 : vector<16x1xf32>
    %392 = vector.broadcast %391 : vector<16x1xf32> to vector<16x32xf32>
    %393 = arith.subf %383, %392 : vector<16x32xf32>
    %394 = arith.mulf %393, %393 : vector<16x32xf32>
    %cst_155 = arith.constant dense<0.000000e+00> : vector<16xf32>
    %395 = vector.multi_reduction <add>, %394, %cst_155 [1] : vector<16x32xf32> to vector<16xf32>
    %396 = vector.shape_cast %395 : vector<16xf32> to vector<16x1xf32>
    %cst_156 = arith.constant 3.200000e+01 : f32
    %397 = vector.broadcast %cst_156 : f32 to vector<16x1xf32>
    %398 = arith.divf %396, %397 : vector<16x1xf32>
    %399 = vector.broadcast %391 : vector<16x1xf32> to vector<16x32xf32>
    %400 = arith.subf %383, %399 : vector<16x32xf32>
    %cst_157 = arith.constant 9.99999974E-6 : f32
    %401 = vector.broadcast %cst_157 : f32 to vector<16x1xf32>
    %402 = arith.addf %398, %401 : vector<16x1xf32>
    %403 = math.rsqrt %402 : vector<16x1xf32>
    %404 = vector.broadcast %403 : vector<16x1xf32> to vector<16x32xf32>
    %405 = arith.mulf %400, %404 : vector<16x32xf32>
    %406 = vector.broadcast %385 : vector<1x32xf32> to vector<16x32xf32>
    %407 = arith.mulf %405, %406 : vector<16x32xf32>
    %408 = vector.broadcast %387 : vector<1x32xf32> to vector<16x32xf32>
    %409 = arith.addf %407, %408 : vector<16x32xf32>
    %410 = arith.truncf %409 : vector<16x32xf32> to vector<16x32xbf16>
    %c0_158 = arith.constant 0 : index
    %c0_159 = arith.constant 0 : index
    %411 = vector.load %arg16[%c0_158, %c0_159] : memref<32x128xbf16, #tpu.memory_space<vmem>>, vector<32x128xbf16>
    %cst_160 = arith.constant dense<0.000000e+00> : vector<16x128xf32>
    %412 = tpu.matmul %410, %411, %cst_160 {dimension_numbers = #tpu.dot_dimension_numbers<[1], [0], [0], [1], [0, 0, 1, 1], [], []>} : vector<16x32xbf16>, vector<32x128xbf16>, vector<16x128xf32> -> vector<16x128xf32>
    %c0_161 = arith.constant 0 : index
    %c0_162 = arith.constant 0 : index
    %413 = vector.load %arg17[%c0_161, %c0_162] : memref<1x128xf32, #tpu.memory_space<vmem>>, vector<1x128xf32>
    %414 = vector.broadcast %413 : vector<1x128xf32> to vector<16x128xf32>
    %415 = arith.addf %412, %414 : vector<16x128xf32>
    %c0_163 = arith.constant 0 : index
    %c0_164 = arith.constant 0 : index
    %416 = vector.load %arg18[%c0_163, %c0_164] : memref<16x128xf32, #tpu.memory_space<vmem>>, vector<16x128xf32>
    tpu.vector_store %arg18[%c0_163, %c0_164], %415 {strides = array<i32>} : memref<16x128xf32, #tpu.memory_space<vmem>>, vector<16x128xf32>,
    return
  }
}

</mosaic_0001>

<llo_original>
// kernel: mul.8
$region0: #{mul.8}
  %s0 = inlined_call_operand.vmem [shape: f32[2,8], index: 0, kind: input, shape index: {}]
  %s1 = inlined_call_operand.vmem [shape: f32[16], index: 1, kind: output, shape index: {}]
  $region1: #{mul.8} parent=0
    #allocation0 [shape = 'u8[4096]{0}', space=vmem, size = 0x1000, scoped, tag = 'scoped mem for output reshape']
    #allocation1 [shape = 'u8[4096]{0}', space=vmem, size = 0x1000, scoped, tag = 'scoped mem for input reshape']
    %s3 = sshllo.u32 0, 2
    %v4 = vld [vmem:[%s0] sm:%s3]
    %5 = vst [vmem:[#allocation1] sm:%s3] %v4
    %v6 = vld [vmem:[#allocation1] sm:$0x1]
    %vm7 = vcmask 64512
    %8 = vst.msk [vmem:[#allocation0] sm:$0x1] %vm7, %v6
    %s9 = scalar_lea.vmem [#allocation1], 1
    %v10 = vld [vmem:[%s9] sm:$0x1]
    %11 = vrot.lane.b32.xlu0 %v10, 8
    %v12 = vpop.permute.xlu0 %11
    %vm13 = vcmask 130112
    %14 = vst.msk [vmem:[#allocation0] sm:$0x1] %vm13, %v12
    %s16 = sshllo.u32 0, 1
    %v18 = vld [vmem:[#allocation0] sm:%s16]
    %s19 = sshllo.u32 0, 1
    %20 = vst [vmem:[%s1] sm:%s19] %v18

// kernel: multitask_forward.1
$region0: #{multitask_forward.1}
  #allocation0 [shape = 'u32[]', space=smem, size = 0x4, offset = 0x4, fixed_abs, tag = 'smem constant byte address 0x4 - core index']
  #allocation1 [shape = 'u32[144,128]{1,0:T(1,128)}', space=vmem, size = 0x12000, scoped, tag = 'internal scratch']
  %s0 = inlined_call_operand.vmem [shape: f32[16,32], index: 0, kind: input, shape index: {}]
  %s1 = inlined_call_operand.vmem [shape: f32[16,16], index: 1, kind: input, shape index: {}]
  %s2 = inlined_call_operand.vmem [shape: f32[1,32], index: 2, kind: input, shape index: {}]
  %s3 = inlined_call_operand.vmem [shape: f32[1,32], index: 3, kind: input, shape index: {}]
  %s4 = inlined_call_operand.vmem [shape: bf16[2,32,96], index: 4, kind: input, shape index: {}]
  %s5 = inlined_call_operand.vmem [shape: f32[2,1,96], index: 5, kind: input, shape index: {}]
  %s6 = inlined_call_operand.vmem [shape: bf16[2,32,32], index: 6, kind: input, shape index: {}]
  %s7 = inlined_call_operand.vmem [shape: f32[2,1,32], index: 7, kind: input, shape index: {}]
  %s8 = inlined_call_operand.vmem [shape: f32[2,1,32], index: 8, kind: input, shape index: {}]
  %s9 = inlined_call_operand.vmem [shape: f32[2,1,32], index: 9, kind: input, shape index: {}]
  %s10 = inlined_call_operand.vmem [shape: bf16[2,32,64], index: 10, kind: input, shape index: {}]
  %s11 = inlined_call_operand.vmem [shape: f32[2,1,64], index: 11, kind: input, shape index: {}]
  %s12 = inlined_call_operand.vmem [shape: bf16[2,64,32], index: 12, kind: input, shape index: {}]
  %s13 = inlined_call_operand.vmem [shape: f32[2,1,32], index: 13, kind: input, shape index: {}]
  %s14 = inlined_call_operand.vmem [shape: f32[2,1,32], index: 14, kind: input, shape index: {}]
  %s15 = inlined_call_operand.vmem [shape: f32[2,1,32], index: 15, kind: input, shape index: {}]
  %s16 = inlined_call_operand.vmem [shape: bf16[32,128], index: 16, kind: input, shape index: {}]
  %s17 = inlined_call_operand.vmem [shape: f32[1,128], index: 17, kind: input, shape index: {}]
  %s18 = inlined_call_operand.vmem [shape: f32[16,128], index: 18, kind: output, shape index: {}]
  %s19 = sld [smem:[#allocation0]]
  $region82: #{multitask_forward.1} parent=0
    _
  %s21 = ssub.s32 1, %s19
  %s22 = scalar_select 0, %s21, %s19
  // Predicated region
  $region2: #{multitask_forward.1} parent=0 // pred_check
    _
  $region3: #{multitask_forward.1} parent=0 // pred_check_branch
    %24 = sbr.rel (0) target = $region5
  $region4: #{multitask_forward.1} parent=0 // pred_region
    _
  $region5: #{multitask_forward.1} parent=0 // pred_fallthru
    _
  // Predicated region
  $region6: #{multitask_forward.1} parent=0 // pred_check
    _
  $region7: #{multitask_forward.1} parent=0 // pred_check_branch
    %26 = sbr.rel (0) target = $region9
  $region8: #{multitask_forward.1} parent=0 // pred_region
    _
  $region9: #{multitask_forward.1} parent=0 // pred_fallthru
    _
  // Predicated region
  $region10: #{multitask_forward.1} parent=0 // pred_check
    _
  $region11: #{multitask_forward.1} parent=0 // pred_check_branch
    %28 = sbr.rel (0) target = $region13
  $region12: #{multitask_forward.1} parent=0 // pred_region
    _
  $region13: #{multitask_forward.1} parent=0 // pred_fallthru
    _
  // Predicated region
  $region14: #{multitask_forward.1} parent=0 // pred_check
    _
  $region15: #{multitask_forward.1} parent=0 // pred_check_branch
    %30 = sbr.rel (0) target = $region17
  $region16: #{multitask_forward.1} parent=0 // pred_region
    _
  $region17: #{multitask_forward.1} parent=0 // pred_fallthru
    _
  // Predicated region
  $region18: #{multitask_forward.1} parent=0 // pred_check
    _
  $region19: #{multitask_forward.1} parent=0 // pred_check_branch
    %32 = sbr.rel (0) target = $region21
  $region20: #{multitask_forward.1} parent=0 // pred_region
    _
  $region21: #{multitask_forward.1} parent=0 // pred_fallthru
    _
  // Predicated region
  $region22: #{multitask_forward.1} parent=0 // pred_check
    _
  $region23: #{multitask_forward.1} parent=0 // pred_check_branch
    %34 = sbr.rel (0) target = $region25
  $region24: #{multitask_forward.1} parent=0 // pred_region
    _
  $region25: #{multitask_forward.1} parent=0 // pred_fallthru
    _
  // Predicated region
  $region26: #{multitask_forward.1} parent=0 // pred_check
    _
  $region27: #{multitask_forward.1} parent=0 // pred_check_branch
    %36 = sbr.rel (0) target = $region29
  $region28: #{multitask_forward.1} parent=0 // pred_region
    _
  $region29: #{multitask_forward.1} parent=0 // pred_fallthru
    _
  // Predicated region
  $region30: #{multitask_forward.1} parent=0 // pred_check
    _
  $region31: #{multitask_forward.1} parent=0 // pred_check_branch
    %38 = sbr.rel (0) target = $region33
  $region32: #{multitask_forward.1} parent=0 // pred_region
    _
  $region33: #{multitask_forward.1} parent=0 // pred_fallthru
    _
  // Predicated region
  $region34: #{multitask_forward.1} parent=0 // pred_check
    _
  $region35: #{multitask_forward.1} parent=0 // pred_check_branch
    %40 = sbr.rel (0) target = $region37
  $region36: #{multitask_forward.1} parent=0 // pred_region
    _
  $region37: #{multitask_forward.1} parent=0 // pred_fallthru
    _
  // Predicated region
  $region38: #{multitask_forward.1} parent=0 // pred_check
    _
  $region39: #{multitask_forward.1} parent=0 // pred_check_branch
    %42 = sbr.rel (0) target = $region41
  $region40: #{multitask_forward.1} parent=0 // pred_region
    _
  $region41: #{multitask_forward.1} parent=0 // pred_fallthru
    _
  // Predicated region
  $region42: #{multitask_forward.1} parent=0 // pred_check
    _
  $region43: #{multitask_forward.1} parent=0 // pred_check_branch
    %44 = sbr.rel (0) target = $region45
  $region44: #{multitask_forward.1} parent=0 // pred_region
    _
  $region45: #{multitask_forward.1} parent=0 // pred_fallthru
    _
  // Predicated region
  $region46: #{multitask_forward.1} parent=0 // pred_check
    _
  $region47: #{multitask_forward.1} parent=0 // pred_check_branch
    %46 = sbr.rel (0) target = $region49
  $region48: #{multitask_forward.1} parent=0 // pred_region
    _
  $region49: #{multitask_forward.1} parent=0 // pred_fallthru
    _
  // Predicated region
  $region50: #{multitask_forward.1} parent=0 // pred_check
    _
  $region51: #{multitask_forward.1} parent=0 // pred_check_branch
    %48 = sbr.rel (0) target = $region53
  $region52: #{multitask_forward.1} parent=0 // pred_region
    _
  $region53: #{multitask_forward.1} parent=0 // pred_fallthru
    _
  // Predicated region
  $region54: #{multitask_forward.1} parent=0 // pred_check
    _
  $region55: #{multitask_forward.1} parent=0 // pred_check_branch
    %50 = sbr.rel (0) target = $region57
  $region56: #{multitask_forward.1} parent=0 // pred_region
    _
  $region57: #{multitask_forward.1} parent=0 // pred_fallthru
    _
  // Predicated region
  $region58: #{multitask_forward.1} parent=0 // pred_check
    _
  $region59: #{multitask_forward.1} parent=0 // pred_check_branch
    %52 = sbr.rel (0) target = $region61
  $region60: #{multitask_forward.1} parent=0 // pred_region
    _
  $region61: #{multitask_forward.1} parent=0 // pred_fallthru
    _
  // Predicated region
  $region62: #{multitask_forward.1} parent=0 // pred_check
    _
  $region63: #{multitask_forward.1} parent=0 // pred_check_branch
    %54 = sbr.rel (0) target = $region65
  $region64: #{multitask_forward.1} parent=0 // pred_region
    _
  $region65: #{multitask_forward.1} parent=0 // pred_fallthru
    _
  // Predicated region
  $region66: #{multitask_forward.1} parent=0 // pred_check
    _
  $region67: #{multitask_forward.1} parent=0 // pred_check_branch
    %56 = sbr.rel (0) target = $region69
  $region68: #{multitask_forward.1} parent=0 // pred_region
    _
  $region69: #{multitask_forward.1} parent=0 // pred_fallthru
    _
  // Predicated region
  $region70: #{multitask_forward.1} parent=0 // pred_check
    _
  $region71: #{multitask_forward.1} parent=0 // pred_check_branch
    %58 = sbr.rel (0) target = $region73
  $region72: #{multitask_forward.1} parent=0 // pred_region
    _
  $region73: #{multitask_forward.1} parent=0 // pred_fallthru
    _
  %v60 = vld [vmem:[%s0] sm:$0xff]
  %v61 = vld [vmem:[%s0 + $0x8] sm:$0xff]
  %v62 = vld [vmem:[%s2] sm:$0x1]
  %v63 = vld [vmem:[%s3] sm:$0x1]
  %vm64 = vcmask 261120
  %v65 = vsel %vm64, %v60, 0.0
  %66 = vadd.xlane.f32.xlu0 %v65
  %v67 = vpop.xlane.xlu0 %66
  %v68 = vsel %vm64, %v61, 0.0
  %69 = vadd.xlane.f32.xlu0 %v68
  %v70 = vpop.xlane.xlu0 %69
  %v71 = vrcp.pop 32.0
  %v72 = vmul.f32 %v67, %v71
  %v73 = vmul.f32 %v70, %v71
  %v74 = vsub.f32 %v60, %v72
  %v75 = vsub.f32 %v61, %v73
  %v76 = vmul.f32 %v74, %v74
  %v77 = vmul.f32 %v75, %v75
  %v78 = vsel %vm64, %v76, 0.0
  %79 = vadd.xlane.f32.xlu0 %v78
  %v80 = vpop.xlane.xlu0 %79
  %v81 = vsel %vm64, %v77, 0.0
  %82 = vadd.xlane.f32.xlu0 %v81
  %v83 = vpop.xlane.xlu0 %82
  %v84 = vmul.f32 %v80, %v71
  %v85 = vmul.f32 %v83, %v71
  %v86 = vadd.f32 %v84, 1e-05
  %v87 = vadd.f32 %v85, 1e-05
  %v88 = vrsqrt.pop %v86
  %v89 = vrsqrt.pop %v87
  %v90 = vmul.f32 %v74, %v88
  %v91 = vmul.f32 %v75, %v89
  %v93 = vlaneseq
  %v94 = vshrl.u32 %v93, 7
  %v95 = vsub.s32 0, %v94
  %v96 = vrot.slane %v62, %v95
  %v98 = vmul.f32 %v90, %v96
  %v99 = vmul.f32 %v91, %v96
  %v101 = vlaneseq
  %v102 = vshrl.u32 %v101, 7
  %v103 = vsub.s32 0, %v102
  %v104 = vrot.slane %v63, %v103
  %v106 = vadd.f32 %v98, %v104
  %v107 = vadd.f32 %v99, %v104
  %v108 = vld [vmem:[%s1] sm:$0xff]
  %v109 = vld [vmem:[%s1 + $0x8] sm:$0xff]
  %v110 = vpack.c.bf16 %v107, %v106
  %v111 = vld [vmem:[%s4] sm:$0xf]
  %v112 = vld [vmem:[%s4 + $0x4] sm:$0xf]
  %v113 = vld [vmem:[%s4 + $0x8] sm:$0xf]
  %v114 = vld [vmem:[%s4 + $0xc] sm:$0xf]
  %v115 = vld [vmem:[%s5] sm:$0x1]
  %v117 = vlaneseq
  %v118 = vshrl.u32 %v117, 7
  %v119 = vsub.s32 0, %v118
  %v120 = vrot.slane %v115, %v119
  %v126 = vunpack.c.l.b16 %v111
  %v127 = vunpack.c.l.b16 %v112
  %v128 = vunpack.c.l.b16 %v113
  %v129 = vunpack.c.l.b16 %v114
  %v130 = vpack.c.b16 %v127, %v126
  %v131 = vpack.c.b16 %v129, %v128
  %v135 = vsel %vm64, %v110, 0
  %137 = vmatprep.subr.bf16.mxu0 0
  %138 = vmatpush1.bf16.msra.mxu0 %v130
  %139 = vmatprep.subr.bf16.mxu0 0
  %140 = vmatpush1.bf16.msra.mxu0 %v131
  %141 = vmatprep.subr.bf16.mxu0 0
  %142 = vmatpush1.bf16.msra.mxu0 0
  %143 = vmatprep.subr.bf16.mxu0 0
  %144 = vmatpush1.bf16.msra.mxu0 0
  %145 = vmatprep.subr.bf16.mxu0 0
  %146 = vmatpush1.bf16.msra.mxu0 0
  %147 = vmatprep.subr.bf16.mxu0 0
  %148 = vmatpush1.bf16.msra.mxu0 0
  %149 = vmatprep.subr.bf16.mxu0 0
  %150 = vmatpush1.bf16.msra.mxu0 0
  %151 = vmatprep.subr.bf16.mxu0 0
  %152 = vmatpush1.bf16.msra.mxu0 0
  %153 = vmatprep.subr.bf16.mxu0 0
  %154 = vmatpush1.bf16.msra.mxu0 0
  %155 = vmatprep.subr.bf16.mxu0 0
  %156 = vmatpush1.bf16.msra.mxu0 0
  %157 = vmatprep.subr.bf16.mxu0 0
  %158 = vmatpush1.bf16.msra.mxu0 0
  %159 = vmatprep.subr.bf16.mxu0 0
  %160 = vmatpush1.bf16.msra.mxu0 0
  %161 = vmatprep.subr.bf16.mxu0 0
  %162 = vmatpush1.bf16.msra.mxu0 0
  %163 = vmatprep.subr.bf16.mxu0 0
  %164 = vmatpush1.bf16.msra.mxu0 0
  %165 = vmatprep.subr.bf16.mxu0 0
  %166 = vmatpush1.bf16.msra.mxu0 0
  %167 = vmatprep.subr.bf16.mxu0 0
  %168 = vmatpush1.bf16.msra.mxu0 0
  %169 = vmatprep.mubr.bf16.mxu0 0
  %170 = vmatmul.mubr.bf16.gmra.mrb[0].mxu0 %v135
  %v171 = vpop.f32.mrb[0].mxu0
  %v172 = vadd.f32 %v120, %v171
  %v173 = vpop.f32.mrb[0].mxu0
  %v174 = vpop.f32.mrb[0].mxu0
  %v175 = vadd.f32 %v120, %v174
  %v176 = vpop.f32.mrb[0].mxu0
  %177 = vdwg.mxu0
  %v178 = vpack.c.bf16 %v175, %v172
  %180 = vrot.lane.b32.xlu0 %v178, 96
  %v181 = vpop.permute.xlu0 %180
  %vm182 = vcmask 64512
  %v184 = vsel %vm182, %v178, 0
  %v187 = vsel %vm182, %v181, 0
  %189 = vmatprep.subr.bf16.mxu0 0
  %190 = vmatpush1.bf16.xpose.msra.mxu0 %v187
  %191 = vmatprep.subr.bf16.mxu0 0
  %192 = vmatpush1.bf16.xpose.msra.mxu0 0
  %193 = vmatprep.subr.bf16.mxu0 0
  %194 = vmatpush1.bf16.xpose.msra.mxu0 0
  %195 = vmatprep.subr.bf16.mxu0 0
  %196 = vmatpush1.bf16.xpose.msra.mxu0 0
  %197 = vmatprep.subr.bf16.mxu0 0
  %198 = vmatpush1.bf16.xpose.msra.mxu0 0
  %199 = vmatprep.subr.bf16.mxu0 0
  %200 = vmatpush1.bf16.xpose.msra.mxu0 0
  %201 = vmatprep.subr.bf16.mxu0 0
  %202 = vmatpush1.bf16.xpose.msra.mxu0 0
  %203 = vmatprep.subr.bf16.mxu0 0
  %204 = vmatpush1.bf16.xpose.msra.mxu0 0
  %205 = vmatprep.subr.bf16.mxu0 0
  %206 = vmatpush1.bf16.xpose.msra.mxu0 0
  %207 = vmatprep.subr.bf16.mxu0 0
  %208 = vmatpush1.bf16.xpose.msra.mxu0 0
  %209 = vmatprep.subr.bf16.mxu0 0
  %210 = vmatpush1.bf16.xpose.msra.mxu0 0
  %211 = vmatprep.subr.bf16.mxu0 0
  %212 = vmatpush1.bf16.xpose.msra.mxu0 0
  %213 = vmatprep.subr.bf16.mxu0 0
  %214 = vmatpush1.bf16.xpose.msra.mxu0 0
  %215 = vmatprep.subr.bf16.mxu0 0
  %216 = vmatpush1.bf16.xpose.msra.mxu0 0
  %217 = vmatprep.subr.bf16.mxu0 0
  %218 = vmatpush1.bf16.xpose.msra.mxu0 0
  %219 = vmatprep.subr.bf16.mxu0 0
  %220 = vmatpush1.bf16.xpose.msra.mxu0 0
  %221 = vmatprep.mubr.bf16.mxu0 0
  %222 = vmatmul.mubr.bf16.gmra.mrb[0].mxu0 %v184
  %v223 = vpop.f32.mrb[0].mxu0
  %v224 = vadd.f32 0.0, %v223
  %v225 = vpop.f32.mrb[0].mxu0
  %v226 = vpop.f32.mrb[0].mxu0
  %v227 = vadd.f32 0.0, %v226
  %v228 = vpop.f32.mrb[0].mxu0
  %229 = vdwg.mxu0
  %v230 = vmul.f32 %v224, 0.35355338
  %v231 = vmul.f32 %v227, 0.35355338
  %v232 = vadd.f32 %v230, %v108
  %v233 = vadd.f32 %v231, %v109
  %vm234 = vcmask 130048
  %v235 = vsel %vm234, %v232, -inf
  %236 = vmax.xlane.f32.xlu0 %v235
  %v237 = vpop.xlane.xlu0 %236
  %v238 = vsel %vm234, %v233, -inf
  %239 = vmax.xlane.f32.xlu0 %v238
  %v240 = vpop.xlane.xlu0 %239
  %v241 = vsub.f32 %v232, %v237
  %v242 = vsub.f32 %v233, %v240
  %v243 = vmul.f32 %v241, 1.442695
  %v244 = vpow.pop %v243
  %v245 = vmul.f32 %v242, 1.442695
  %v246 = vpow.pop %v245
  %v247 = vsel %vm234, %v244, 0.0
  %248 = vadd.xlane.f32.xlu0 %v247
  %v249 = vpop.xlane.xlu0 %248
  %v250 = vsel %vm234, %v246, 0.0
  %251 = vadd.xlane.f32.xlu0 %v250
  %v252 = vpop.xlane.xlu0 %251
  %v253 = vrcp.pop %v249
  %v254 = vrcp.pop %v252
  %v255 = vmul.f32 %v244, %v253
  %v256 = vmul.f32 %v246, %v254
  %v257 = vpack.c.bf16 %v256, %v255
  %258 = vrot.lane.b32.xlu0 %v178, 64
  %v259 = vpop.permute.xlu0 %258
  %v262 = vsel %vm234, %v257, 0
  %264 = vmatprep.subr.bf16.mxu0 0
  %265 = vmatpush1.bf16.msra.mxu0 %v259
  %266 = vmatprep.subr.bf16.mxu0 0
  %267 = vmatpush1.bf16.msra.mxu0 0
  %268 = vmatprep.subr.bf16.mxu0 0
  %269 = vmatpush1.bf16.msra.mxu0 0
  %270 = vmatprep.subr.bf16.mxu0 0
  %271 = vmatpush1.bf16.msra.mxu0 0
  %272 = vmatprep.subr.bf16.mxu0 0
  %273 = vmatpush1.bf16.msra.mxu0 0
  %274 = vmatprep.subr.bf16.mxu0 0
  %275 = vmatpush1.bf16.msra.mxu0 0
  %276 = vmatprep.subr.bf16.mxu0 0
  %277 = vmatpush1.bf16.msra.mxu0 0
  %278 = vmatprep.subr.bf16.mxu0 0
  %279 = vmatpush1.bf16.msra.mxu0 0
  %280 = vmatprep.subr.bf16.mxu0 0
  %281 = vmatpush1.bf16.msra.mxu0 0
  %282 = vmatprep.subr.bf16.mxu0 0
  %283 = vmatpush1.bf16.msra.mxu0 0
  %284 = vmatprep.subr.bf16.mxu0 0
  %285 = vmatpush1.bf16.msra.mxu0 0
  %286 = vmatprep.subr.bf16.mxu0 0
  %287 = vmatpush1.bf16.msra.mxu0 0
  %288 = vmatprep.subr.bf16.mxu0 0
  %289 = vmatpush1.bf16.msra.mxu0 0
  %290 = vmatprep.subr.bf16.mxu0 0
  %291 = vmatpush1.bf16.msra.mxu0 0
  %292 = vmatprep.subr.bf16.mxu0 0
  %293 = vmatpush1.bf16.msra.mxu0 0
  %294 = vmatprep.subr.bf16.mxu0 0
  %295 = vmatpush1.bf16.msra.mxu0 0
  %296 = vmatprep.mubr.bf16.mxu0 0
  %297 = vmatmul.mubr.bf16.gmra.mrb[0].mxu0 %v262
  %v298 = vpop.f32.mrb[0].mxu0
  %v299 = vadd.f32 0.0, %v298
  %v300 = vpop.f32.mrb[0].mxu0
  %v301 = vpop.f32.mrb[0].mxu0
  %v302 = vadd.f32 0.0, %v301
  %v303 = vpop.f32.mrb[0].mxu0
  %304 = vdwg.mxu0
  %305 = vrot.lane.b32.xlu0 %v178, 120
  %v306 = vpop.permute.xlu0 %305
  %307 = vrot.lane.b32.xlu0 %v178, 88
  %v308 = vpop.permute.xlu0 %307
  %v310 = vsel %vm182, %v306, 0
  %v313 = vsel %vm182, %v308, 0
  %315 = vmatprep.subr.bf16.mxu0 0
  %316 = vmatpush1.bf16.xpose.msra.mxu0 %v313
  %317 = vmatprep.subr.bf16.mxu0 0
  %318 = vmatpush1.bf16.xpose.msra.mxu0 0
  %319 = vmatprep.subr.bf16.mxu0 0
  %320 = vmatpush1.bf16.xpose.msra.mxu0 0
  %321 = vmatprep.subr.bf16.mxu0 0
  %322 = vmatpush1.bf16.xpose.msra.mxu0 0
  %323 = vmatprep.subr.bf16.mxu0 0
  %324 = vmatpush1.bf16.xpose.msra.mxu0 0
  %325 = vmatprep.subr.bf16.mxu0 0
  %326 = vmatpush1.bf16.xpose.msra.mxu0 0
  %327 = vmatprep.subr.bf16.mxu0 0
  %328 = vmatpush1.bf16.xpose.msra.mxu0 0
  %329 = vmatprep.subr.bf16.mxu0 0
  %330 = vmatpush1.bf16.xpose.msra.mxu0 0
  %331 = vmatprep.subr.bf16.mxu0 0
  %332 = vmatpush1.bf16.xpose.msra.mxu0 0
  %333 = vmatprep.subr.bf16.mxu0 0
  %334 = vmatpush1.bf16.xpose.msra.mxu0 0
  %335 = vmatprep.subr.bf16.mxu0 0
  %336 = vmatpush1.bf16.xpose.msra.mxu0 0
  %337 = vmatprep.subr.bf16.mxu0 0
  %338 = vmatpush1.bf16.xpose.msra.mxu0 0
  %339 = vmatprep.subr.bf16.mxu0 0
  %340 = vmatpush1.bf16.xpose.msra.mxu0 0
  %341 = vmatprep.subr.bf16.mxu0 0
  %342 = vmatpush1.bf16.xpose.msra.mxu0 0
  %343 = vmatprep.subr.bf16.mxu0 0
  %344 = vmatpush1.bf16.xpose.msra.mxu0 0
  %345 = vmatprep.subr.bf16.mxu0 0
  %346 = vmatpush1.bf16.xpose.msra.mxu0 0
  %347 = vmatprep.mubr.bf16.mxu0 0
  %348 = vmatmul.mubr.bf16.gmra.mrb[0].mxu0 %v310
  %v349 = vpop.f32.mrb[0].mxu0
  %v350 = vadd.f32 0.0, %v349
  %v351 = vpop.f32.mrb[0].mxu0
  %v352 = vpop.f32.mrb[0].mxu0
  %v353 = vadd.f32 0.0, %v352
  %v354 = vpop.f32.mrb[0].mxu0
  %355 = vdwg.mxu0
  %v356 = vmul.f32 %v350, 0.35355338
  %v357 = vmul.f32 %v353, 0.35355338
  %v358 = vadd.f32 %v356, %v108
  %v359 = vadd.f32 %v357, %v109
  %v360 = vsel %vm234, %v358, -inf
  %361 = vmax.xlane.f32.xlu0 %v360
  %v362 = vpop.xlane.xlu0 %361
  %v363 = vsel %vm234, %v359, -inf
  %364 = vmax.xlane.f32.xlu0 %v363
  %v365 = vpop.xlane.xlu0 %364
  %v366 = vsub.f32 %v358, %v362
  %v367 = vsub.f32 %v359, %v365
  %v368 = vmul.f32 %v366, 1.442695
  %v369 = vpow.pop %v368
  %v370 = vmul.f32 %v367, 1.442695
  %v371 = vpow.pop %v370
  %v372 = vsel %vm234, %v369, 0.0
  %373 = vadd.xlane.f32.xlu0 %v372
  %v374 = vpop.xlane.xlu0 %373
  %v375 = vsel %vm234, %v371, 0.0
  %376 = vadd.xlane.f32.xlu0 %v375
  %v377 = vpop.xlane.xlu0 %376
  %v378 = vrcp.pop %v374
  %v379 = vrcp.pop %v377
  %v380 = vmul.f32 %v369, %v378
  %v381 = vmul.f32 %v371, %v379
  %v382 = vpack.c.bf16 %v381, %v380
  %383 = vrot.lane.b32.xlu0 %v178, 56
  %v384 = vpop.permute.xlu0 %383
  %v387 = vsel %vm234, %v382, 0
  %389 = vmatprep.subr.bf16.mxu0 0
  %390 = vmatpush1.bf16.msra.mxu0 %v384
  %391 = vmatprep.subr.bf16.mxu0 0
  %392 = vmatpush1.bf16.msra.mxu0 0
  %393 = vmatprep.subr.bf16.mxu0 0
  %394 = vmatpush1.bf16.msra.mxu0 0
  %395 = vmatprep.subr.bf16.mxu0 0
  %396 = vmatpush1.bf16.msra.mxu0 0
  %397 = vmatprep.subr.bf16.mxu0 0
  %398 = vmatpush1.bf16.msra.mxu0 0
  %399 = vmatprep.subr.bf16.mxu0 0
  %400 = vmatpush1.bf16.msra.mxu0 0
  %401 = vmatprep.subr.bf16.mxu0 0
  %402 = vmatpush1.bf16.msra.mxu0 0
  %403 = vmatprep.subr.bf16.mxu0 0
  %404 = vmatpush1.bf16.msra.mxu0 0
  %405 = vmatprep.subr.bf16.mxu0 0
  %406 = vmatpush1.bf16.msra.mxu0 0
  %407 = vmatprep.subr.bf16.mxu0 0
  %408 = vmatpush1.bf16.msra.mxu0 0
  %409 = vmatprep.subr.bf16.mxu0 0
  %410 = vmatpush1.bf16.msra.mxu0 0
  %411 = vmatprep.subr.bf16.mxu0 0
  %412 = vmatpush1.bf16.msra.mxu0 0
  %413 = vmatprep.subr.bf16.mxu0 0
  %414 = vmatpush1.bf16.msra.mxu0 0
  %415 = vmatprep.subr.bf16.mxu0 0
  %416 = vmatpush1.bf16.msra.mxu0 0
  %417 = vmatprep.subr.bf16.mxu0 0
  %418 = vmatpush1.bf16.msra.mxu0 0
  %419 = vmatprep.subr.bf16.mxu0 0
  %420 = vmatpush1.bf16.msra.mxu0 0
  %421 = vmatprep.mubr.bf16.mxu0 0
  %422 = vmatmul.mubr.bf16.gmra.mrb[0].mxu0 %v387
  %v423 = vpop.f32.mrb[0].mxu0
  %v424 = vadd.f32 0.0, %v423
  %v425 = vpop.f32.mrb[0].mxu0
  %v426 = vpop.f32.mrb[0].mxu0
  %v427 = vadd.f32 0.0, %v426
  %v428 = vpop.f32.mrb[0].mxu0
  %429 = vdwg.mxu0
  %430 = vrot.lane.b32.xlu0 %v178, 112
  %v431 = vpop.permute.xlu0 %430
  %432 = vrot.lane.b32.xlu0 %v178, 80
  %v433 = vpop.permute.xlu0 %432
  %v435 = vsel %vm182, %v431, 0
  %v438 = vsel %vm182, %v433, 0
  %440 = vmatprep.subr.bf16.mxu0 0
  %441 = vmatpush1.bf16.xpose.msra.mxu0 %v438
  %442 = vmatprep.subr.bf16.mxu0 0
  %443 = vmatpush1.bf16.xpose.msra.mxu0 0
  %444 = vmatprep.subr.bf16.mxu0 0
  %445 = vmatpush1.bf16.xpose.msra.mxu0 0
  %446 = vmatprep.subr.bf16.mxu0 0
  %447 = vmatpush1.bf16.xpose.msra.mxu0 0
  %448 = vmatprep.subr.bf16.mxu0 0
  %449 = vmatpush1.bf16.xpose.msra.mxu0 0
  %450 = vmatprep.subr.bf16.mxu0 0
  %451 = vmatpush1.bf16.xpose.msra.mxu0 0
  %452 = vmatprep.subr.bf16.mxu0 0
  %453 = vmatpush1.bf16.xpose.msra.mxu0 0
  %454 = vmatprep.subr.bf16.mxu0 0
  %455 = vmatpush1.bf16.xpose.msra.mxu0 0
  %456 = vmatprep.subr.bf16.mxu0 0
  %457 = vmatpush1.bf16.xpose.msra.mxu0 0
  %458 = vmatprep.subr.bf16.mxu0 0
  %459 = vmatpush1.bf16.xpose.msra.mxu0 0
  %460 = vmatprep.subr.bf16.mxu0 0
  %461 = vmatpush1.bf16.xpose.msra.mxu0 0
  %462 = vmatprep.subr.bf16.mxu0 0
  %463 = vmatpush1.bf16.xpose.msra.mxu0 0
  %464 = vmatprep.subr.bf16.mxu0 0
  %465 = vmatpush1.bf16.xpose.msra.mxu0 0
  %466 = vmatprep.subr.bf16.mxu0 0
  %467 = vmatpush1.bf16.xpose.msra.mxu0 0
  %468 = vmatprep.subr.bf16.mxu0 0
  %469 = vmatpush1.bf16.xpose.msra.mxu0 0
  %470 = vmatprep.subr.bf16.mxu0 0
  %471 = vmatpush1.bf16.xpose.msra.mxu0 0
  %472 = vmatprep.mubr.bf16.mxu0 0
  %473 = vmatmul.mubr.bf16.gmra.mrb[0].mxu0 %v435
  %v474 = vpop.f32.mrb[0].mxu0
  %v475 = vadd.f32 0.0, %v474
  %v476 = vpop.f32.mrb[0].mxu0
  %v477 = vpop.f32.mrb[0].mxu0
  %v478 = vadd.f32 0.0, %v477
  %v479 = vpop.f32.mrb[0].mxu0
  %480 = vdwg.mxu0
  %v481 = vmul.f32 %v475, 0.35355338
  %v482 = vmul.f32 %v478, 0.35355338
  %v483 = vadd.f32 %v481, %v108
  %v484 = vadd.f32 %v482, %v109
  %v485 = vsel %vm234, %v483, -inf
  %486 = vmax.xlane.f32.xlu0 %v485
  %v487 = vpop.xlane.xlu0 %486
  %v488 = vsel %vm234, %v484, -inf
  %489 = vmax.xlane.f32.xlu0 %v488
  %v490 = vpop.xlane.xlu0 %489
  %v491 = vsub.f32 %v483, %v487
  %v492 = vsub.f32 %v484, %v490
  %v493 = vmul.f32 %v491, 1.442695
  %v494 = vpow.pop %v493
  %v495 = vmul.f32 %v492, 1.442695
  %v496 = vpow.pop %v495
  %v497 = vsel %vm234, %v494, 0.0
  %498 = vadd.xlane.f32.xlu0 %v497
  %v499 = vpop.xlane.xlu0 %498
  %v500 = vsel %vm234, %v496, 0.0
  %501 = vadd.xlane.f32.xlu0 %v500
  %v502 = vpop.xlane.xlu0 %501
  %v503 = vrcp.pop %v499
  %v504 = vrcp.pop %v502
  %v505 = vmul.f32 %v494, %v503
  %v506 = vmul.f32 %v496, %v504
  %v507 = vpack.c.bf16 %v506, %v505
  %508 = vrot.lane.b32.xlu0 %v178, 48
  %v509 = vpop.permute.xlu0 %508
  %v512 = vsel %vm234, %v507, 0
  %514 = vmatprep.subr.bf16.mxu0 0
  %515 = vmatpush1.bf16.msra.mxu0 %v509
  %516 = vmatprep.subr.bf16.mxu0 0
  %517 = vmatpush1.bf16.msra.mxu0 0
  %518 = vmatprep.subr.bf16.mxu0 0
  %519 = vmatpush1.bf16.msra.mxu0 0
  %520 = vmatprep.subr.bf16.mxu0 0
  %521 = vmatpush1.bf16.msra.mxu0 0
  %522 = vmatprep.subr.bf16.mxu0 0
  %523 = vmatpush1.bf16.msra.mxu0 0
  %524 = vmatprep.subr.bf16.mxu0 0
  %525 = vmatpush1.bf16.msra.mxu0 0
  %526 = vmatprep.subr.bf16.mxu0 0
  %527 = vmatpush1.bf16.msra.mxu0 0
  %528 = vmatprep.subr.bf16.mxu0 0
  %529 = vmatpush1.bf16.msra.mxu0 0
  %530 = vmatprep.subr.bf16.mxu0 0
  %531 = vmatpush1.bf16.msra.mxu0 0
  %532 = vmatprep.subr.bf16.mxu0 0
  %533 = vmatpush1.bf16.msra.mxu0 0
  %534 = vmatprep.subr.bf16.mxu0 0
  %535 = vmatpush1.bf16.msra.mxu0 0
  %536 = vmatprep.subr.bf16.mxu0 0
  %537 = vmatpush1.bf16.msra.mxu0 0
  %538 = vmatprep.subr.bf16.mxu0 0
  %539 = vmatpush1.bf16.msra.mxu0 0
  %540 = vmatprep.subr.bf16.mxu0 0
  %541 = vmatpush1.bf16.msra.mxu0 0
  %542 = vmatprep.subr.bf16.mxu0 0
  %543 = vmatpush1.bf16.msra.mxu0 0
  %544 = vmatprep.subr.bf16.mxu0 0
  %545 = vmatpush1.bf16.msra.mxu0 0
  %546 = vmatprep.mubr.bf16.mxu0 0
  %547 = vmatmul.mubr.bf16.gmra.mrb[0].mxu0 %v512
  %v548 = vpop.f32.mrb[0].mxu0
  %v549 = vadd.f32 0.0, %v548
  %v550 = vpop.f32.mrb[0].mxu0
  %v551 = vpop.f32.mrb[0].mxu0
  %v552 = vadd.f32 0.0, %v551
  %v553 = vpop.f32.mrb[0].mxu0
  %554 = vdwg.mxu0
  %555 = vrot.lane.b32.xlu0 %v178, 104
  %v556 = vpop.permute.xlu0 %555
  %557 = vrot.lane.b32.xlu0 %v178, 72
  %v558 = vpop.permute.xlu0 %557
  %v560 = vsel %vm182, %v556, 0
  %v563 = vsel %vm182, %v558, 0
  %565 = vmatprep.subr.bf16.mxu0 0
  %566 = vmatpush1.bf16.xpose.msra.mxu0 %v563
  %567 = vmatprep.subr.bf16.mxu0 0
  %568 = vmatpush1.bf16.xpose.msra.mxu0 0
  %569 = vmatprep.subr.bf16.mxu0 0
  %570 = vmatpush1.bf16.xpose.msra.mxu0 0
  %571 = vmatprep.subr.bf16.mxu0 0
  %572 = vmatpush1.bf16.xpose.msra.mxu0 0
  %573 = vmatprep.subr.bf16.mxu0 0
  %574 = vmatpush1.bf16.xpose.msra.mxu0 0
  %575 = vmatprep.subr.bf16.mxu0 0
  %576 = vmatpush1.bf16.xpose.msra.mxu0 0
  %577 = vmatprep.subr.bf16.mxu0 0
  %578 = vmatpush1.bf16.xpose.msra.mxu0 0
  %579 = vmatprep.subr.bf16.mxu0 0
  %580 = vmatpush1.bf16.xpose.msra.mxu0 0
  %581 = vmatprep.subr.bf16.mxu0 0
  %582 = vmatpush1.bf16.xpose.msra.mxu0 0
  %583 = vmatprep.subr.bf16.mxu0 0
  %584 = vmatpush1.bf16.xpose.msra.mxu0 0
  %585 = vmatprep.subr.bf16.mxu0 0
  %586 = vmatpush1.bf16.xpose.msra.mxu0 0
  %587 = vmatprep.subr.bf16.mxu0 0
  %588 = vmatpush1.bf16.xpose.msra.mxu0 0
  %589 = vmatprep.subr.bf16.mxu0 0
  %590 = vmatpush1.bf16.xpose.msra.mxu0 0
  %591 = vmatprep.subr.bf16.mxu0 0
  %592 = vmatpush1.bf16.xpose.msra.mxu0 0
  %593 = vmatprep.subr.bf16.mxu0 0
  %594 = vmatpush1.bf16.xpose.msra.mxu0 0
  %595 = vmatprep.subr.bf16.mxu0 0
  %596 = vmatpush1.bf16.xpose.msra.mxu0 0
  %597 = vmatprep.mubr.bf16.mxu0 0
  %598 = vmatmul.mubr.bf16.gmra.mrb[0].mxu0 %v560
  %v599 = vpop.f32.mrb[0].mxu0
  %v600 = vadd.f32 0.0, %v599
  %v601 = vpop.f32.mrb[0].mxu0
  %v602 = vpop.f32.mrb[0].mxu0
  %v603 = vadd.f32 0.0, %v602
  %v604 = vpop.f32.mrb[0].mxu0
  %605 = vdwg.mxu0
  %v606 = vmul.f32 %v600, 0.35355338
  %v607 = vmul.f32 %v603, 0.35355338
  %v608 = vadd.f32 %v606, %v108
  %v609 = vadd.f32 %v607, %v109
  %v610 = vsel %vm234, %v608, -inf
  %611 = vmax.xlane.f32.xlu0 %v610
  %v612 = vpop.xlane.xlu0 %611
  %v613 = vsel %vm234, %v609, -inf
  %614 = vmax.xlane.f32.xlu0 %v613
  %v615 = vpop.xlane.xlu0 %614
  %v616 = vsub.f32 %v608, %v612
  %v617 = vsub.f32 %v609, %v615
  %v618 = vmul.f32 %v616, 1.442695
  %v619 = vpow.pop %v618
  %v620 = vmul.f32 %v617, 1.442695
  %v621 = vpow.pop %v620
  %v622 = vsel %vm234, %v619, 0.0
  %623 = vadd.xlane.f32.xlu0 %v622
  %v624 = vpop.xlane.xlu0 %623
  %v625 = vsel %vm234, %v621, 0.0
  %626 = vadd.xlane.f32.xlu0 %v625
  %v627 = vpop.xlane.xlu0 %626
  %v628 = vrcp.pop %v624
  %v629 = vrcp.pop %v627
  %v630 = vmul.f32 %v619, %v628
  %v631 = vmul.f32 %v621, %v629
  %v632 = vpack.c.bf16 %v631, %v630
  %633 = vrot.lane.b32.xlu0 %v178, 40
  %v634 = vpop.permute.xlu0 %633
  %v637 = vsel %vm234, %v632, 0
  %639 = vmatprep.subr.bf16.mxu0 0
  %640 = vmatpush1.bf16.msra.mxu0 %v634
  %641 = vmatprep.subr.bf16.mxu0 0
  %642 = vmatpush1.bf16.msra.mxu0 0
  %643 = vmatprep.subr.bf16.mxu0 0
  %644 = vmatpush1.bf16.msra.mxu0 0
  %645 = vmatprep.subr.bf16.mxu0 0
  %646 = vmatpush1.bf16.msra.mxu0 0
  %647 = vmatprep.subr.bf16.mxu0 0
  %648 = vmatpush1.bf16.msra.mxu0 0
  %649 = vmatprep.subr.bf16.mxu0 0
  %650 = vmatpush1.bf16.msra.mxu0 0
  %651 = vmatprep.subr.bf16.mxu0 0
  %652 = vmatpush1.bf16.msra.mxu0 0
  %653 = vmatprep.subr.bf16.mxu0 0
  %654 = vmatpush1.bf16.msra.mxu0 0
  %655 = vmatprep.subr.bf16.mxu0 0
  %656 = vmatpush1.bf16.msra.mxu0 0
  %657 = vmatprep.subr.bf16.mxu0 0
  %658 = vmatpush1.bf16.msra.mxu0 0
  %659 = vmatprep.subr.bf16.mxu0 0
  %660 = vmatpush1.bf16.msra.mxu0 0
  %661 = vmatprep.subr.bf16.mxu0 0
  %662 = vmatpush1.bf16.msra.mxu0 0
  %663 = vmatprep.subr.bf16.mxu0 0
  %664 = vmatpush1.bf16.msra.mxu0 0
  %665 = vmatprep.subr.bf16.mxu0 0
  %666 = vmatpush1.bf16.msra.mxu0 0
  %667 = vmatprep.subr.bf16.mxu0 0
  %668 = vmatpush1.bf16.msra.mxu0 0
  %669 = vmatprep.subr.bf16.mxu0 0
  %670 = vmatpush1.bf16.msra.mxu0 0
  %671 = vmatprep.mubr.bf16.mxu0 0
  %672 = vmatmul.mubr.bf16.gmra.mrb[0].mxu0 %v637
  %v673 = vpop.f32.mrb[0].mxu0
  %v674 = vadd.f32 0.0, %v673
  %v675 = vpop.f32.mrb[0].mxu0
  %v676 = vpop.f32.mrb[0].mxu0
  %v677 = vadd.f32 0.0, %v676
  %v678 = vpop.f32.mrb[0].mxu0
  %679 = vdwg.mxu0
  %682 = vrot.lane.b32.xlu0 %v424, 8
  %v683 = vpop.permute.xlu0 %682
  %684 = vrot.lane.b32.xlu0 %v427, 8
  %v685 = vpop.permute.xlu0 %684
  %690 = vrot.lane.b32.xlu0 %v549, 16
  %v691 = vpop.permute.xlu0 %690
  %692 = vrot.lane.b32.xlu0 %v552, 16
  %v693 = vpop.permute.xlu0 %692
  %698 = vrot.lane.b32.xlu0 %v674, 24
  %v699 = vpop.permute.xlu0 %698
  %700 = vrot.lane.b32.xlu0 %v677, 24
  %v701 = vpop.permute.xlu0 %700
  %v704 = vsel %vm182, %v299, %v683
  %v705 = vsel %vm182, %v302, %v685
  %v706 = vsel %vm234, %v704, %v691
  %v707 = vsel %vm234, %v705, %v693
  %vm708 = vcmask 195584
  %v709 = vsel %vm708, %v706, %v699
  %v710 = vsel %vm708, %v707, %v701
  %v711 = vpack.c.bf16 %v710, %v709
  %v712 = vld [vmem:[%s6] sm:$0xf]
  %v713 = vld [vmem:[%s6 + $0x4] sm:$0xf]
  %v714 = vld [vmem:[%s6 + $0x8] sm:$0xf]
  %v715 = vld [vmem:[%s6 + $0xc] sm:$0xf]
  %v716 = vld [vmem:[%s7] sm:$0x1]
  %v718 = vlaneseq
  %v719 = vshrl.u32 %v718, 7
  %v720 = vsub.s32 0, %v719
  %v721 = vrot.slane %v716, %v720
  %v727 = vunpack.c.l.b16 %v712
  %v728 = vunpack.c.l.b16 %v713
  %v729 = vunpack.c.l.b16 %v714
  %v730 = vunpack.c.l.b16 %v715
  %v731 = vpack.c.b16 %v728, %v727
  %v732 = vpack.c.b16 %v730, %v729
  %v736 = vsel %vm64, %v711, 0
  %738 = vmatprep.subr.bf16.mxu0 0
  %739 = vmatpush1.bf16.msra.mxu0 %v731
  %740 = vmatprep.subr.bf16.mxu0 0
  %741 = vmatpush1.bf16.msra.mxu0 %v732
  %742 = vmatprep.subr.bf16.mxu0 0
  %743 = vmatpush1.bf16.msra.mxu0 0
  %744 = vmatprep.subr.bf16.mxu0 0
  %745 = vmatpush1.bf16.msra.mxu0 0
  %746 = vmatprep.subr.bf16.mxu0 0
  %747 = vmatpush1.bf16.msra.mxu0 0
  %748 = vmatprep.subr.bf16.mxu0 0
  %749 = vmatpush1.bf16.msra.mxu0 0
  %750 = vmatprep.subr.bf16.mxu0 0
  %751 = vmatpush1.bf16.msra.mxu0 0
  %752 = vmatprep.subr.bf16.mxu0 0
  %753 = vmatpush1.bf16.msra.mxu0 0
  %754 = vmatprep.subr.bf16.mxu0 0
  %755 = vmatpush1.bf16.msra.mxu0 0
  %756 = vmatprep.subr.bf16.mxu0 0
  %757 = vmatpush1.bf16.msra.mxu0 0
  %758 = vmatprep.subr.bf16.mxu0 0
  %759 = vmatpush1.bf16.msra.mxu0 0
  %760 = vmatprep.subr.bf16.mxu0 0
  %761 = vmatpush1.bf16.msra.mxu0 0
  %762 = vmatprep.subr.bf16.mxu0 0
  %763 = vmatpush1.bf16.msra.mxu0 0
  %764 = vmatprep.subr.bf16.mxu0 0
  %765 = vmatpush1.bf16.msra.mxu0 0
  %766 = vmatprep.subr.bf16.mxu0 0
  %767 = vmatpush1.bf16.msra.mxu0 0
  %768 = vmatprep.subr.bf16.mxu0 0
  %769 = vmatpush1.bf16.msra.mxu0 0
  %770 = vmatprep.mubr.bf16.mxu0 0
  %771 = vmatmul.mubr.bf16.gmra.mrb[0].mxu0 %v736
  %v772 = vpop.f32.mrb[0].mxu0
  %v773 = vadd.f32 %v721, %v772
  %v774 = vpop.f32.mrb[0].mxu0
  %v775 = vpop.f32.mrb[0].mxu0
  %v776 = vadd.f32 %v721, %v775
  %v777 = vpop.f32.mrb[0].mxu0
  %778 = vdwg.mxu0
  %v779 = vadd.f32 %v106, %v773
  %v780 = vadd.f32 %v107, %v776
  %v781 = vld [vmem:[%s8] sm:$0x1]
  %v782 = vld [vmem:[%s9] sm:$0x1]
  %v783 = vsel %vm64, %v779, 0.0
  %784 = vadd.xlane.f32.xlu0 %v783
  %v785 = vpop.xlane.xlu0 %784
  %v786 = vsel %vm64, %v780, 0.0
  %787 = vadd.xlane.f32.xlu0 %v786
  %v788 = vpop.xlane.xlu0 %787
  %v789 = vmul.f32 %v785, %v71
  %v790 = vmul.f32 %v788, %v71
  %v791 = vsub.f32 %v779, %v789
  %v792 = vsub.f32 %v780, %v790
  %v793 = vmul.f32 %v791, %v791
  %v794 = vmul.f32 %v792, %v792
  %v795 = vsel %vm64, %v793, 0.0
  %796 = vadd.xlane.f32.xlu0 %v795
  %v797 = vpop.xlane.xlu0 %796
  %v798 = vsel %vm64, %v794, 0.0
  %799 = vadd.xlane.f32.xlu0 %v798
  %v800 = vpop.xlane.xlu0 %799
  %v801 = vmul.f32 %v797, %v71
  %v802 = vmul.f32 %v800, %v71
  %v803 = vadd.f32 %v801, 1e-05
  %v804 = vadd.f32 %v802, 1e-05
  %v805 = vrsqrt.pop %v803
  %v806 = vrsqrt.pop %v804
  %v807 = vmul.f32 %v791, %v805
  %v808 = vmul.f32 %v792, %v806
  %v810 = vlaneseq
  %v811 = vshrl.u32 %v810, 7
  %v812 = vsub.s32 0, %v811
  %v813 = vrot.slane %v781, %v812
  %v815 = vmul.f32 %v807, %v813
  %v816 = vmul.f32 %v808, %v813
  %v818 = vlaneseq
  %v819 = vshrl.u32 %v818, 7
  %v820 = vsub.s32 0, %v819
  %v821 = vrot.slane %v782, %v820
  %v823 = vadd.f32 %v815, %v821
  %v824 = vadd.f32 %v816, %v821
  %v825 = vpack.c.bf16 %v824, %v823
  %v826 = vld [vmem:[%s10] sm:$0xf]
  %v827 = vld [vmem:[%s10 + $0x4] sm:$0xf]
  %v828 = vld [vmem:[%s10 + $0x8] sm:$0xf]
  %v829 = vld [vmem:[%s10 + $0xc] sm:$0xf]
  %v830 = vld [vmem:[%s11] sm:$0x1]
  %v832 = vlaneseq
  %v833 = vshrl.u32 %v832, 7
  %v834 = vsub.s32 0, %v833
  %v835 = vrot.slane %v830, %v834
  %v841 = vunpack.c.l.b16 %v826
  %v842 = vunpack.c.l.b16 %v827
  %v843 = vunpack.c.l.b16 %v828
  %v844 = vunpack.c.l.b16 %v829
  %v845 = vpack.c.b16 %v842, %v841
  %v846 = vpack.c.b16 %v844, %v843
  %v850 = vsel %vm64, %v825, 0
  %852 = vmatprep.subr.bf16.mxu0 0
  %853 = vmatpush1.bf16.msra.mxu0 %v845
  %854 = vmatprep.subr.bf16.mxu0 0
  %855 = vmatpush1.bf16.msra.mxu0 %v846
  %856 = vmatprep.subr.bf16.mxu0 0
  %857 = vmatpush1.bf16.msra.mxu0 0
  %858 = vmatprep.subr.bf16.mxu0 0
  %859 = vmatpush1.bf16.msra.mxu0 0
  %860 = vmatprep.subr.bf16.mxu0 0
  %861 = vmatpush1.bf16.msra.mxu0 0
  %862 = vmatprep.subr.bf16.mxu0 0
  %863 = vmatpush1.bf16.msra.mxu0 0
  %864 = vmatprep.subr.bf16.mxu0 0
  %865 = vmatpush1.bf16.msra.mxu0 0
  %866 = vmatprep.subr.bf16.mxu0 0
  %867 = vmatpush1.bf16.msra.mxu0 0
  %868 = vmatprep.subr.bf16.mxu0 0
  %869 = vmatpush1.bf16.msra.mxu0 0
  %870 = vmatprep.subr.bf16.mxu0 0
  %871 = vmatpush1.bf16.msra.mxu0 0
  %872 = vmatprep.subr.bf16.mxu0 0
  %873 = vmatpush1.bf16.msra.mxu0 0
  %874 = vmatprep.subr.bf16.mxu0 0
  %875 = vmatpush1.bf16.msra.mxu0 0
  %876 = vmatprep.subr.bf16.mxu0 0
  %877 = vmatpush1.bf16.msra.mxu0 0
  %878 = vmatprep.subr.bf16.mxu0 0
  %879 = vmatpush1.bf16.msra.mxu0 0
  %880 = vmatprep.subr.bf16.mxu0 0
  %881 = vmatpush1.bf16.msra.mxu0 0
  %882 = vmatprep.subr.bf16.mxu0 0
  %883 = vmatpush1.bf16.msra.mxu0 0
  %884 = vmatprep.mubr.bf16.mxu0 0
  %885 = vmatmul.mubr.bf16.gmra.mrb[0].mxu0 %v850
  %v886 = vpop.f32.mrb[0].mxu0
  %v887 = vadd.f32 %v835, %v886
  %v888 = vpop.f32.mrb[0].mxu0
  %v889 = vpop.f32.mrb[0].mxu0
  %v890 = vadd.f32 %v835, %v889
  %v891 = vpop.f32.mrb[0].mxu0
  %892 = vdwg.mxu0
  %v893 = vmul.f32 %v887, %v887
  %v894 = vmul.f32 %v890, %v890
  %v895 = vmul.f32 %v887, %v893
  %v896 = vmul.f32 %v890, %v894
  %v897 = vmul.f32 %v895, 0.044715
  %v898 = vmul.f32 %v896, 0.044715
  %v899 = vadd.f32 %v887, %v897
  %v900 = vadd.f32 %v890, %v898
  %v901 = vmul.f32 %v899, 0.7978846
  %v902 = vmul.f32 %v900, 0.7978846
  %v903 = vtanh.pop %v901
  %v904 = vtanh.pop %v902
  %v905 = vadd.f32 %v903, 1.0
  %v906 = vadd.f32 %v904, 1.0
  %v907 = vmul.f32 %v905, 0.5
  %v908 = vmul.f32 %v906, 0.5
  %v909 = vmul.f32 %v887, %v907
  %v910 = vmul.f32 %v890, %v908
  %v911 = vpack.c.bf16 %v910, %v909
  %v912 = vld [vmem:[%s12] sm:$0xf]
  %v913 = vld [vmem:[%s12 + $0x4] sm:$0xf]
  %v914 = vld [vmem:[%s12 + $0x8] sm:$0xf]
  %v915 = vld [vmem:[%s12 + $0xc] sm:$0xf]
  %v916 = vld [vmem:[%s12 + $0x10] sm:$0xf]
  %v917 = vld [vmem:[%s12 + $0x14] sm:$0xf]
  %v918 = vld [vmem:[%s12 + $0x18] sm:$0xf]
  %v919 = vld [vmem:[%s12 + $0x1c] sm:$0xf]
  %v920 = vld [vmem:[%s13] sm:$0x1]
  %v922 = vlaneseq
  %v923 = vshrl.u32 %v922, 7
  %v924 = vsub.s32 0, %v923
  %v925 = vrot.slane %v920, %v924
  %v935 = vunpack.c.l.b16 %v912
  %v936 = vunpack.c.l.b16 %v913
  %v937 = vunpack.c.l.b16 %v914
  %v938 = vunpack.c.l.b16 %v915
  %v939 = vunpack.c.l.b16 %v916
  %v940 = vunpack.c.l.b16 %v917
  %v941 = vunpack.c.l.b16 %v918
  %v942 = vunpack.c.l.b16 %v919
  %v943 = vpack.c.b16 %v936, %v935
  %v944 = vpack.c.b16 %v938, %v937
  %v945 = vpack.c.b16 %v940, %v939
  %v946 = vpack.c.b16 %v942, %v941
  %vm951 = vcmask 523264
  %v953 = vsel %vm951, %v911, 0
  %955 = vmatprep.subr.bf16.mxu0 0
  %956 = vmatpush1.bf16.msra.mxu0 %v943
  %957 = vmatprep.subr.bf16.mxu0 0
  %958 = vmatpush1.bf16.msra.mxu0 %v944
  %959 = vmatprep.subr.bf16.mxu0 0
  %960 = vmatpush1.bf16.msra.mxu0 %v945
  %961 = vmatprep.subr.bf16.mxu0 0
  %962 = vmatpush1.bf16.msra.mxu0 %v946
  %963 = vmatprep.subr.bf16.mxu0 0
  %964 = vmatpush1.bf16.msra.mxu0 0
  %965 = vmatprep.subr.bf16.mxu0 0
  %966 = vmatpush1.bf16.msra.mxu0 0
  %967 = vmatprep.subr.bf16.mxu0 0
  %968 = vmatpush1.bf16.msra.mxu0 0
  %969 = vmatprep.subr.bf16.mxu0 0
  %970 = vmatpush1.bf16.msra.mxu0 0
  %971 = vmatprep.subr.bf16.mxu0 0
  %972 = vmatpush1.bf16.msra.mxu0 0
  %973 = vmatprep.subr.bf16.mxu0 0
  %974 = vmatpush1.bf16.msra.mxu0 0
  %975 = vmatprep.subr.bf16.mxu0 0
  %976 = vmatpush1.bf16.msra.mxu0 0
  %977 = vmatprep.subr.bf16.mxu0 0
  %978 = vmatpush1.bf16.msra.mxu0 0
  %979 = vmatprep.subr.bf16.mxu0 0
  %980 = vmatpush1.bf16.msra.mxu0 0
  %981 = vmatprep.subr.bf16.mxu0 0
  %982 = vmatpush1.bf16.msra.mxu0 0
  %983 = vmatprep.subr.bf16.mxu0 0
  %984 = vmatpush1.bf16.msra.mxu0 0
  %985 = vmatprep.subr.bf16.mxu0 0
  %986 = vmatpush1.bf16.msra.mxu0 0
  %987 = vmatprep.mubr.bf16.mxu0 0
  %988 = vmatmul.mubr.bf16.gmra.mrb[0].mxu0 %v953
  %v989 = vpop.f32.mrb[0].mxu0
  %v990 = vadd.f32 %v925, %v989
  %v991 = vpop.f32.mrb[0].mxu0
  %v992 = vpop.f32.mrb[0].mxu0
  %v993 = vadd.f32 %v925, %v992
  %v994 = vpop.f32.mrb[0].mxu0
  %995 = vdwg.mxu0
  %v996 = vadd.f32 %v823, %v990
  %v997 = vadd.f32 %v824, %v993
  %v998 = vld [vmem:[%s14] sm:$0x1]
  %v999 = vld [vmem:[%s15] sm:$0x1]
  %v1000 = vsel %vm64, %v996, 0.0
  %1001 = vadd.xlane.f32.xlu0 %v1000
  %v1002 = vpop.xlane.xlu0 %1001
  %v1003 = vsel %vm64, %v997, 0.0
  %1004 = vadd.xlane.f32.xlu0 %v1003
  %v1005 = vpop.xlane.xlu0 %1004
  %v1006 = vmul.f32 %v1002, %v71
  %v1007 = vmul.f32 %v1005, %v71
  %v1008 = vsub.f32 %v996, %v1006
  %v1009 = vsub.f32 %v997, %v1007
  %v1010 = vmul.f32 %v1008, %v1008
  %v1011 = vmul.f32 %v1009, %v1009
  %v1012 = vsel %vm64, %v1010, 0.0
  %1013 = vadd.xlane.f32.xlu0 %v1012
  %v1014 = vpop.xlane.xlu0 %1013
  %v1015 = vsel %vm64, %v1011, 0.0
  %1016 = vadd.xlane.f32.xlu0 %v1015
  %v1017 = vpop.xlane.xlu0 %1016
  %v1018 = vmul.f32 %v1014, %v71
  %v1019 = vmul.f32 %v1017, %v71
  %v1020 = vadd.f32 %v1018, 1e-05
  %v1021 = vadd.f32 %v1019, 1e-05
  %v1022 = vrsqrt.pop %v1020
  %v1023 = vrsqrt.pop %v1021
  %v1024 = vmul.f32 %v1008, %v1022
  %v1025 = vmul.f32 %v1009, %v1023
  %v1027 = vlaneseq
  %v1028 = vshrl.u32 %v1027, 7
  %v1029 = vsub.s32 0, %v1028
  %v1030 = vrot.slane %v998, %v1029
  %v1032 = vmul.f32 %v1024, %v1030
  %v1033 = vmul.f32 %v1025, %v1030
  %v1035 = vlaneseq
  %v1036 = vshrl.u32 %v1035, 7
  %v1037 = vsub.s32 0, %v1036
  %v1038 = vrot.slane %v999, %v1037
  %v1040 = vadd.f32 %v1032, %v1038
  %v1041 = vadd.f32 %v1033, %v1038
  %v1042 = vpack.c.bf16 %v1041, %v1040
  %s1043 = scalar_lea.vmem %s4, 16
  %v1044 = vld [vmem:[%s1043] sm:$0xf]
  %v1045 = vld [vmem:[%s1043 + $0x4] sm:$0xf]
  %v1046 = vld [vmem:[%s1043 + $0x8] sm:$0xf]
  %v1047 = vld [vmem:[%s1043 + $0xc] sm:$0xf]
  %s1048 = scalar_lea.vmem %s5, 1
  %v1049 = vld [vmem:[%s1048] sm:$0x1]
  %v1051 = vlaneseq
  %v1052 = vshrl.u32 %v1051, 7
  %v1053 = vsub.s32 0, %v1052
  %v1054 = vrot.slane %v1049, %v1053
  %v1060 = vunpack.c.l.b16 %v1044
  %v1061 = vunpack.c.l.b16 %v1045
  %v1062 = vunpack.c.l.b16 %v1046
  %v1063 = vunpack.c.l.b16 %v1047
  %v1064 = vpack.c.b16 %v1061, %v1060
  %v1065 = vpack.c.b16 %v1063, %v1062
  %v1069 = vsel %vm64, %v1042, 0
  %1071 = vmatprep.subr.bf16.mxu0 0
  %1072 = vmatpush1.bf16.msra.mxu0 %v1064
  %1073 = vmatprep.subr.bf16.mxu0 0
  %1074 = vmatpush1.bf16.msra.mxu0 %v1065
  %1075 = vmatprep.subr.bf16.mxu0 0
  %1076 = vmatpush1.bf16.msra.mxu0 0
  %1077 = vmatprep.subr.bf16.mxu0 0
  %1078 = vmatpush1.bf16.msra.mxu0 0
  %1079 = vmatprep.subr.bf16.mxu0 0
  %1080 = vmatpush1.bf16.msra.mxu0 0
  %1081 = vmatprep.subr.bf16.mxu0 0
  %1082 = vmatpush1.bf16.msra.mxu0 0
  %1083 = vmatprep.subr.bf16.mxu0 0
  %1084 = vmatpush1.bf16.msra.mxu0 0
  %1085 = vmatprep.subr.bf16.mxu0 0
  %1086 = vmatpush1.bf16.msra.mxu0 0
  %1087 = vmatprep.subr.bf16.mxu0 0
  %1088 = vmatpush1.bf16.msra.mxu0 0
  %1089 = vmatprep.subr.bf16.mxu0 0
  %1090 = vmatpush1.bf16.msra.mxu0 0
  %1091 = vmatprep.subr.bf16.mxu0 0
  %1092 = vmatpush1.bf16.msra.mxu0 0
  %1093 = vmatprep.subr.bf16.mxu0 0
  %1094 = vmatpush1.bf16.msra.mxu0 0
  %1095 = vmatprep.subr.bf16.mxu0 0
  %1096 = vmatpush1.bf16.msra.mxu0 0
  %1097 = vmatprep.subr.bf16.mxu0 0
  %1098 = vmatpush1.bf16.msra.mxu0 0
  %1099 = vmatprep.subr.bf16.mxu0 0
  %1100 = vmatpush1.bf16.msra.mxu0 0
  %1101 = vmatprep.subr.bf16.mxu0 0
  %1102 = vmatpush1.bf16.msra.mxu0 0
  %1103 = vmatprep.mubr.bf16.mxu0 0
  %1104 = vmatmul.mubr.bf16.gmra.mrb[0].mxu0 %v1069
  %v1105 = vpop.f32.mrb[0].mxu0
  %v1106 = vadd.f32 %v1054, %v1105
  %v1107 = vpop.f32.mrb[0].mxu0
  %v1108 = vpop.f32.mrb[0].mxu0
  %v1109 = vadd.f32 %v1054, %v1108
  %v1110 = vpop.f32.mrb[0].mxu0
  %1111 = vdwg.mxu0
  %v1112 = vpack.c.bf16 %v1109, %v1106
  %1114 = vrot.lane.b32.xlu0 %v1112, 96
  %v1115 = vpop.permute.xlu0 %1114
  %v1117 = vsel %vm182, %v1112, 0
  %v1120 = vsel %vm182, %v1115, 0
  %1122 = vmatprep.subr.bf16.mxu0 0
  %1123 = vmatpush1.bf16.xpose.msra.mxu0 %v1120
  %1124 = vmatprep.subr.bf16.mxu0 0
  %1125 = vmatpush1.bf16.xpose.msra.mxu0 0
  %1126 = vmatprep.subr.bf16.mxu0 0
  %1127 = vmatpush1.bf16.xpose.msra.mxu0 0
  %1128 = vmatprep.subr.bf16.mxu0 0
  %1129 = vmatpush1.bf16.xpose.msra.mxu0 0
  %1130 = vmatprep.subr.bf16.mxu0 0
  %1131 = vmatpush1.bf16.xpose.msra.mxu0 0
  %1132 = vmatprep.subr.bf16.mxu0 0
  %1133 = vmatpush1.bf16.xpose.msra.mxu0 0
  %1134 = vmatprep.subr.bf16.mxu0 0
  %1135 = vmatpush1.bf16.xpose.msra.mxu0 0
  %1136 = vmatprep.subr.bf16.mxu0 0
  %1137 = vmatpush1.bf16.xpose.msra.mxu0 0
  %1138 = vmatprep.subr.bf16.mxu0 0
  %1139 = vmatpush1.bf16.xpose.msra.mxu0 0
  %1140 = vmatprep.subr.bf16.mxu0 0
  %1141 = vmatpush1.bf16.xpose.msra.mxu0 0
  %1142 = vmatprep.subr.bf16.mxu0 0
  %1143 = vmatpush1.bf16.xpose.msra.mxu0 0
  %1144 = vmatprep.subr.bf16.mxu0 0
  %1145 = vmatpush1.bf16.xpose.msra.mxu0 0
  %1146 = vmatprep.subr.bf16.mxu0 0
  %1147 = vmatpush1.bf16.xpose.msra.mxu0 0
  %1148 = vmatprep.subr.bf16.mxu0 0
  %1149 = vmatpush1.bf16.xpose.msra.mxu0 0
  %1150 = vmatprep.subr.bf16.mxu0 0
  %1151 = vmatpush1.bf16.xpose.msra.mxu0 0
  %1152 = vmatprep.subr.bf16.mxu0 0
  %1153 = vmatpush1.bf16.xpose.msra.mxu0 0
  %1154 = vmatprep.mubr.bf16.mxu0 0
  %1155 = vmatmul.mubr.bf16.gmra.mrb[0].mxu0 %v1117
  %v1156 = vpop.f32.mrb[0].mxu0
  %v1157 = vadd.f32 0.0, %v1156
  %v1158 = vpop.f32.mrb[0].mxu0
  %v1159 = vpop.f32.mrb[0].mxu0
  %v1160 = vadd.f32 0.0, %v1159
  %v1161 = vpop.f32.mrb[0].mxu0
  %1162 = vdwg.mxu0
  %v1163 = vmul.f32 %v1157, 0.35355338
  %v1164 = vmul.f32 %v1160, 0.35355338
  %v1165 = vadd.f32 %v1163, %v108
  %v1166 = vadd.f32 %v1164, %v109
  %v1167 = vsel %vm234, %v1165, -inf
  %1168 = vmax.xlane.f32.xlu0 %v1167
  %v1169 = vpop.xlane.xlu0 %1168
  %v1170 = vsel %vm234, %v1166, -inf
  %1171 = vmax.xlane.f32.xlu0 %v1170
  %v1172 = vpop.xlane.xlu0 %1171
  %v1173 = vsub.f32 %v1165, %v1169
  %v1174 = vsub.f32 %v1166, %v1172
  %v1175 = vmul.f32 %v1173, 1.442695
  %v1176 = vpow.pop %v1175
  %v1177 = vmul.f32 %v1174, 1.442695
  %v1178 = vpow.pop %v1177
  %v1179 = vsel %vm234, %v1176, 0.0
  %1180 = vadd.xlane.f32.xlu0 %v1179
  %v1181 = vpop.xlane.xlu0 %1180
  %v1182 = vsel %vm234, %v1178, 0.0
  %1183 = vadd.xlane.f32.xlu0 %v1182
  %v1184 = vpop.xlane.xlu0 %1183
  %v1185 = vrcp.pop %v1181
  %v1186 = vrcp.pop %v1184
  %v1187 = vmul.f32 %v1176, %v1185
  %v1188 = vmul.f32 %v1178, %v1186
  %v1189 = vpack.c.bf16 %v1188, %v1187
  %1190 = vrot.lane.b32.xlu0 %v1112, 64
  %v1191 = vpop.permute.xlu0 %1190
  %v1194 = vsel %vm234, %v1189, 0
  %1196 = vmatprep.subr.bf16.mxu0 0
  %1197 = vmatpush1.bf16.msra.mxu0 %v1191
  %1198 = vmatprep.subr.bf16.mxu0 0
  %1199 = vmatpush1.bf16.msra.mxu0 0
  %1200 = vmatprep.subr.bf16.mxu0 0
  %1201 = vmatpush1.bf16.msra.mxu0 0
  %1202 = vmatprep.subr.bf16.mxu0 0
  %1203 = vmatpush1.bf16.msra.mxu0 0
  %1204 = vmatprep.subr.bf16.mxu0 0
  %1205 = vmatpush1.bf16.msra.mxu0 0
  %1206 = vmatprep.subr.bf16.mxu0 0
  %1207 = vmatpush1.bf16.msra.mxu0 0
  %1208 = vmatprep.subr.bf16.mxu0 0
  %1209 = vmatpush1.bf16.msra.mxu0 0
  %1210 = vmatprep.subr.bf16.mxu0 0
  %1211 = vmatpush1.bf16.msra.mxu0 0
  %1212 = vmatprep.subr.bf16.mxu0 0
  %1213 = vmatpush1.bf16.msra.mxu0 0
  %1214 = vmatprep.subr.bf16.mxu0 0
  %1215 = vmatpush1.bf16.msra.mxu0 0
  %1216 = vmatprep.subr.bf16.mxu0 0
  %1217 = vmatpush1.bf16.msra.mxu0 0
  %1218 = vmatprep.subr.bf16.mxu0 0
  %1219 = vmatpush1.bf16.msra.mxu0 0
  %1220 = vmatprep.subr.bf16.mxu0 0
  %1221 = vmatpush1.bf16.msra.mxu0 0
  %1222 = vmatprep.subr.bf16.mxu0 0
  %1223 = vmatpush1.bf16.msra.mxu0 0
  %1224 = vmatprep.subr.bf16.mxu0 0
  %1225 = vmatpush1.bf16.msra.mxu0 0
  %1226 = vmatprep.subr.bf16.mxu0 0
  %1227 = vmatpush1.bf16.msra.mxu0 0
  %1228 = vmatprep.mubr.bf16.mxu0 0
  %1229 = vmatmul.mubr.bf16.gmra.mrb[0].mxu0 %v1194
  %v1230 = vpop.f32.mrb[0].mxu0
  %v1231 = vadd.f32 0.0, %v1230
  %v1232 = vpop.f32.mrb[0].mxu0
  %v1233 = vpop.f32.mrb[0].mxu0
  %v1234 = vadd.f32 0.0, %v1233
  %v1235 = vpop.f32.mrb[0].mxu0
  %1236 = vdwg.mxu0
  %1237 = vrot.lane.b32.xlu0 %v1112, 120
  %v1238 = vpop.permute.xlu0 %1237
  %1239 = vrot.lane.b32.xlu0 %v1112, 88
  %v1240 = vpop.permute.xlu0 %1239
  %v1242 = vsel %vm182, %v1238, 0
  %v1245 = vsel %vm182, %v1240, 0
  %1247 = vmatprep.subr.bf16.mxu0 0
  %1248 = vmatpush1.bf16.xpose.msra.mxu0 %v1245
  %1249 = vmatprep.subr.bf16.mxu0 0
  %1250 = vmatpush1.bf16.xpose.msra.mxu0 0
  %1251 = vmatprep.subr.bf16.mxu0 0
  %1252 = vmatpush1.bf16.xpose.msra.mxu0 0
  %1253 = vmatprep.subr.bf16.mxu0 0
  %1254 = vmatpush1.bf16.xpose.msra.mxu0 0
  %1255 = vmatprep.subr.bf16.mxu0 0
  %1256 = vmatpush1.bf16.xpose.msra.mxu0 0
  %1257 = vmatprep.subr.bf16.mxu0 0
  %1258 = vmatpush1.bf16.xpose.msra.mxu0 0
  %1259 = vmatprep.subr.bf16.mxu0 0
  %1260 = vmatpush1.bf16.xpose.msra.mxu0 0
  %1261 = vmatprep.subr.bf16.mxu0 0
  %1262 = vmatpush1.bf16.xpose.msra.mxu0 0
  %1263 = vmatprep.subr.bf16.mxu0 0
  %1264 = vmatpush1.bf16.xpose.msra.mxu0 0
  %1265 = vmatprep.subr.bf16.mxu0 0
  %1266 = vmatpush1.bf16.xpose.msra.mxu0 0
  %1267 = vmatprep.subr.bf16.mxu0 0
  %1268 = vmatpush1.bf16.xpose.msra.mxu0 0
  %1269 = vmatprep.subr.bf16.mxu0 0
  %1270 = vmatpush1.bf16.xpose.msra.mxu0 0
  %1271 = vmatprep.subr.bf16.mxu0 0
  %1272 = vmatpush1.bf16.xpose.msra.mxu0 0
  %1273 = vmatprep.subr.bf16.mxu0 0
  %1274 = vmatpush1.bf16.xpose.msra.mxu0 0
  %1275 = vmatprep.subr.bf16.mxu0 0
  %1276 = vmatpush1.bf16.xpose.msra.mxu0 0
  %1277 = vmatprep.subr.bf16.mxu0 0
  %1278 = vmatpush1.bf16.xpose.msra.mxu0 0
  %1279 = vmatprep.mubr.bf16.mxu0 0
  %1280 = vmatmul.mubr.bf16.gmra.mrb[0].mxu0 %v1242
  %v1281 = vpop.f32.mrb[0].mxu0
  %v1282 = vadd.f32 0.0, %v1281
  %v1283 = vpop.f32.mrb[0].mxu0
  %v1284 = vpop.f32.mrb[0].mxu0
  %v1285 = vadd.f32 0.0, %v1284
  %v1286 = vpop.f32.mrb[0].mxu0
  %1287 = vdwg.mxu0
  %v1288 = vmul.f32 %v1282, 0.35355338
  %v1289 = vmul.f32 %v1285, 0.35355338
  %v1290 = vadd.f32 %v1288, %v108
  %v1291 = vadd.f32 %v1289, %v109
  %v1292 = vsel %vm234, %v1290, -inf
  %1293 = vmax.xlane.f32.xlu0 %v1292
  %v1294 = vpop.xlane.xlu0 %1293
  %v1295 = vsel %vm234, %v1291, -inf
  %1296 = vmax.xlane.f32.xlu0 %v1295
  %v1297 = vpop.xlane.xlu0 %1296
  %v1298 = vsub.f32 %v1290, %v1294
  %v1299 = vsub.f32 %v1291, %v1297
  %v1300 = vmul.f32 %v1298, 1.442695
  %v1301 = vpow.pop %v1300
  %v1302 = vmul.f32 %v1299, 1.442695
  %v1303 = vpow.pop %v1302
  %v1304 = vsel %vm234, %v1301, 0.0
  %1305 = vadd.xlane.f32.xlu0 %v1304
  %v1306 = vpop.xlane.xlu0 %1305
  %v1307 = vsel %vm234, %v1303, 0.0
  %1308 = vadd.xlane.f32.xlu0 %v1307
  %v1309 = vpop.xlane.xlu0 %1308
  %v1310 = vrcp.pop %v1306
  %v1311 = vrcp.pop %v1309
  %v1312 = vmul.f32 %v1301, %v1310
  %v1313 = vmul.f32 %v1303, %v1311
  %v1314 = vpack.c.bf16 %v1313, %v1312
  %1315 = vrot.lane.b32.xlu0 %v1112, 56
  %v1316 = vpop.permute.xlu0 %1315
  %v1319 = vsel %vm234, %v1314, 0
  %1321 = vmatprep.subr.bf16.mxu0 0
  %1322 = vmatpush1.bf16.msra.mxu0 %v1316
  %1323 = vmatprep.subr.bf16.mxu0 0
  %1324 = vmatpush1.bf16.msra.mxu0 0
  %1325 = vmatprep.subr.bf16.mxu0 0
  %1326 = vmatpush1.bf16.msra.mxu0 0
  %1327 = vmatprep.subr.bf16.mxu0 0
  %1328 = vmatpush1.bf16.msra.mxu0 0
  %1329 = vmatprep.subr.bf16.mxu0 0
  %1330 = vmatpush1.bf16.msra.mxu0 0
  %1331 = vmatprep.subr.bf16.mxu0 0
  %1332 = vmatpush1.bf16.msra.mxu0 0
  %1333 = vmatprep.subr.bf16.mxu0 0
  %1334 = vmatpush1.bf16.msra.mxu0 0
  %1335 = vmatprep.subr.bf16.mxu0 0
  %1336 = vmatpush1.bf16.msra.mxu0 0
  %1337 = vmatprep.subr.bf16.mxu0 0
  %1338 = vmatpush1.bf16.msra.mxu0 0
  %1339 = vmatprep.subr.bf16.mxu0 0
  %1340 = vmatpush1.bf16.msra.mxu0 0
  %1341 = vmatprep.subr.bf16.mxu0 0
  %1342 = vmatpush1.bf16.msra.mxu0 0
  %1343 = vmatprep.subr.bf16.mxu0 0
  %1344 = vmatpush1.bf16.msra.mxu0 0
  %1345 = vmatprep.subr.bf16.mxu0 0
  %1346 = vmatpush1.bf16.msra.mxu0 0
  %1347 = vmatprep.subr.bf16.mxu0 0
  %1348 = vmatpush1.bf16.msra.mxu0 0
  %1349 = vmatprep.subr.bf16.mxu0 0
  %1350 = vmatpush1.bf16.msra.mxu0 0
  %1351 = vmatprep.subr.bf16.mxu0 0
  %1352 = vmatpush1.bf16.msra.mxu0 0
  %1353 = vmatprep.mubr.bf16.mxu0 0
  %1354 = vmatmul.mubr.bf16.gmra.mrb[0].mxu0 %v1319
  %v1355 = vpop.f32.mrb[0].mxu0
  %v1356 = vadd.f32 0.0, %v1355
  %v1357 = vpop.f32.mrb[0].mxu0
  %v1358 = vpop.f32.mrb[0].mxu0
  %v1359 = vadd.f32 0.0, %v1358
  %v1360 = vpop.f32.mrb[0].mxu0
  %1361 = vdwg.mxu0
  %1362 = vrot.lane.b32.xlu0 %v1112, 112
  %v1363 = vpop.permute.xlu0 %1362
  %1364 = vrot.lane.b32.xlu0 %v1112, 80
  %v1365 = vpop.permute.xlu0 %1364
  %v1367 = vsel %vm182, %v1363, 0
  %v1370 = vsel %vm182, %v1365, 0
  %1372 = vmatprep.subr.bf16.mxu0 0
  %1373 = vmatpush1.bf16.xpose.msra.mxu0 %v1370
  %1374 = vmatprep.subr.bf16.mxu0 0
  %1375 = vmatpush1.bf16.xpose.msra.mxu0 0
  %1376 = vmatprep.subr.bf16.mxu0 0
  %1377 = vmatpush1.bf16.xpose.msra.mxu0 0
  %1378 = vmatprep.subr.bf16.mxu0 0
  %1379 = vmatpush1.bf16.xpose.msra.mxu0 0
  %1380 = vmatprep.subr.bf16.mxu0 0
  %1381 = vmatpush1.bf16.xpose.msra.mxu0 0
  %1382 = vmatprep.subr.bf16.mxu0 0
  %1383 = vmatpush1.bf16.xpose.msra.mxu0 0
  %1384 = vmatprep.subr.bf16.mxu0 0
  %1385 = vmatpush1.bf16.xpose.msra.mxu0 0
  %1386 = vmatprep.subr.bf16.mxu0 0
  %1387 = vmatpush1.bf16.xpose.msra.mxu0 0
  %1388 = vmatprep.subr.bf16.mxu0 0
  %1389 = vmatpush1.bf16.xpose.msra.mxu0 0
  %1390 = vmatprep.subr.bf16.mxu0 0
  %1391 = vmatpush1.bf16.xpose.msra.mxu0 0
  %1392 = vmatprep.subr.bf16.mxu0 0
  %1393 = vmatpush1.bf16.xpose.msra.mxu0 0
  %1394 = vmatprep.subr.bf16.mxu0 0
  %1395 = vmatpush1.bf16.xpose.msra.mxu0 0
  %1396 = vmatprep.subr.bf16.mxu0 0
  %1397 = vmatpush1.bf16.xpose.msra.mxu0 0
  %1398 = vmatprep.subr.bf16.mxu0 0
  %1399 = vmatpush1.bf16.xpose.msra.mxu0 0
  %1400 = vmatprep.subr.bf16.mxu0 0
  %1401 = vmatpush1.bf16.xpose.msra.mxu0 0
  %1402 = vmatprep.subr.bf16.mxu0 0
  %1403 = vmatpush1.bf16.xpose.msra.mxu0 0
  %1404 = vmatprep.mubr.bf16.mxu0 0
  %1405 = vmatmul.mubr.bf16.gmra.mrb[0].mxu0 %v1367
  %v1406 = vpop.f32.mrb[0].mxu0
  %v1407 = vadd.f32 0.0, %v1406
  %v1408 = vpop.f32.mrb[0].mxu0
  %v1409 = vpop.f32.mrb[0].mxu0
  %v1410 = vadd.f32 0.0, %v1409
  %v1411 = vpop.f32.mrb[0].mxu0
  %1412 = vdwg.mxu0
  %v1413 = vmul.f32 %v1407, 0.35355338
  %v1414 = vmul.f32 %v1410, 0.35355338
  %v1415 = vadd.f32 %v1413, %v108
  %v1416 = vadd.f32 %v1414, %v109
  %v1417 = vsel %vm234, %v1415, -inf
  %1418 = vmax.xlane.f32.xlu0 %v1417
  %v1419 = vpop.xlane.xlu0 %1418
  %v1420 = vsel %vm234, %v1416, -inf
  %1421 = vmax.xlane.f32.xlu0 %v1420
  %v1422 = vpop.xlane.xlu0 %1421
  %v1423 = vsub.f32 %v1415, %v1419
  %v1424 = vsub.f32 %v1416, %v1422
  %v1425 = vmul.f32 %v1423, 1.442695
  %v1426 = vpow.pop %v1425
  %v1427 = vmul.f32 %v1424, 1.442695
  %v1428 = vpow.pop %v1427
  %v1429 = vsel %vm234, %v1426, 0.0
  %1430 = vadd.xlane.f32.xlu0 %v1429
  %v1431 = vpop.xlane.xlu0 %1430
  %v1432 = vsel %vm234, %v1428, 0.0
  %1433 = vadd.xlane.f32.xlu0 %v1432
  %v1434 = vpop.xlane.xlu0 %1433
  %v1435 = vrcp.pop %v1431
  %v1436 = vrcp.pop %v1434
  %v1437 = vmul.f32 %v1426, %v1435
  %v1438 = vmul.f32 %v1428, %v1436
  %v1439 = vpack.c.bf16 %v1438, %v1437
  %1440 = vrot.lane.b32.xlu0 %v1112, 48
  %v1441 = vpop.permute.xlu0 %1440
  %v1444 = vsel %vm234, %v1439, 0
  %1446 = vmatprep.subr.bf16.mxu0 0
  %1447 = vmatpush1.bf16.msra.mxu0 %v1441
  %1448 = vmatprep.subr.bf16.mxu0 0
  %1449 = vmatpush1.bf16.msra.mxu0 0
  %1450 = vmatprep.subr.bf16.mxu0 0
  %1451 = vmatpush1.bf16.msra.mxu0 0
  %1452 = vmatprep.subr.bf16.mxu0 0
  %1453 = vmatpush1.bf16.msra.mxu0 0
  %1454 = vmatprep.subr.bf16.mxu0 0
  %1455 = vmatpush1.bf16.msra.mxu0 0
  %1456 = vmatprep.subr.bf16.mxu0 0
  %1457 = vmatpush1.bf16.msra.mxu0 0
  %1458 = vmatprep.subr.bf16.mxu0 0
  %1459 = vmatpush1.bf16.msra.mxu0 0
  %1460 = vmatprep.subr.bf16.mxu0 0
  %1461 = vmatpush1.bf16.msra.mxu0 0
  %1462 = vmatprep.subr.bf16.mxu0 0
  %1463 = vmatpush1.bf16.msra.mxu0 0
  %1464 = vmatprep.subr.bf16.mxu0 0
  %1465 = vmatpush1.bf16.msra.mxu0 0
  %1466 = vmatprep.subr.bf16.mxu0 0
  %1467 = vmatpush1.bf16.msra.mxu0 0
  %1468 = vmatprep.subr.bf16.mxu0 0
  %1469 = vmatpush1.bf16.msra.mxu0 0
  %1470 = vmatprep.subr.bf16.mxu0 0
  %1471 = vmatpush1.bf16.msra.mxu0 0
  %1472 = vmatprep.subr.bf16.mxu0 0
  %1473 = vmatpush1.bf16.msra.mxu0 0
  %1474 = vmatprep.subr.bf16.mxu0 0
  %1475 = vmatpush1.bf16.msra.mxu0 0
  %1476 = vmatprep.subr.bf16.mxu0 0
  %1477 = vmatpush1.bf16.msra.mxu0 0
  %1478 = vmatprep.mubr.bf16.mxu0 0
  %1479 = vmatmul.mubr.bf16.gmra.mrb[0].mxu0 %v1444
  %v1480 = vpop.f32.mrb[0].mxu0
  %v1481 = vadd.f32 0.0, %v1480
  %v1482 = vpop.f32.mrb[0].mxu0
  %v1483 = vpop.f32.mrb[0].mxu0
  %v1484 = vadd.f32 0.0, %v1483
  %v1485 = vpop.f32.mrb[0].mxu0
  %1486 = vdwg.mxu0
  %1487 = vrot.lane.b32.xlu0 %v1112, 104
  %v1488 = vpop.permute.xlu0 %1487
  %1489 = vrot.lane.b32.xlu0 %v1112, 72
  %v1490 = vpop.permute.xlu0 %1489
  %v1492 = vsel %vm182, %v1488, 0
  %v1495 = vsel %vm182, %v1490, 0
  %1497 = vmatprep.subr.bf16.mxu0 0
  %1498 = vmatpush1.bf16.xpose.msra.mxu0 %v1495
  %1499 = vmatprep.subr.bf16.mxu0 0
  %1500 = vmatpush1.bf16.xpose.msra.mxu0 0
  %1501 = vmatprep.subr.bf16.mxu0 0
  %1502 = vmatpush1.bf16.xpose.msra.mxu0 0
  %1503 = vmatprep.subr.bf16.mxu0 0
  %1504 = vmatpush1.bf16.xpose.msra.mxu0 0
  %1505 = vmatprep.subr.bf16.mxu0 0
  %1506 = vmatpush1.bf16.xpose.msra.mxu0 0
  %1507 = vmatprep.subr.bf16.mxu0 0
  %1508 = vmatpush1.bf16.xpose.msra.mxu0 0
  %1509 = vmatprep.subr.bf16.mxu0 0
  %1510 = vmatpush1.bf16.xpose.msra.mxu0 0
  %1511 = vmatprep.subr.bf16.mxu0 0
  %1512 = vmatpush1.bf16.xpose.msra.mxu0 0
  %1513 = vmatprep.subr.bf16.mxu0 0
  %1514 = vmatpush1.bf16.xpose.msra.mxu0 0
  %1515 = vmatprep.subr.bf16.mxu0 0
  %1516 = vmatpush1.bf16.xpose.msra.mxu0 0
  %1517 = vmatprep.subr.bf16.mxu0 0
  %1518 = vmatpush1.bf16.xpose.msra.mxu0 0
  %1519 = vmatprep.subr.bf16.mxu0 0
  %1520 = vmatpush1.bf16.xpose.msra.mxu0 0
  %1521 = vmatprep.subr.bf16.mxu0 0
  %1522 = vmatpush1.bf16.xpose.msra.mxu0 0
  %1523 = vmatprep.subr.bf16.mxu0 0
  %1524 = vmatpush1.bf16.xpose.msra.mxu0 0
  %1525 = vmatprep.subr.bf16.mxu0 0
  %1526 = vmatpush1.bf16.xpose.msra.mxu0 0
  %1527 = vmatprep.subr.bf16.mxu0 0
  %1528 = vmatpush1.bf16.xpose.msra.mxu0 0
  %1529 = vmatprep.mubr.bf16.mxu0 0
  %1530 = vmatmul.mubr.bf16.gmra.mrb[0].mxu0 %v1492
  %v1531 = vpop.f32.mrb[0].mxu0
  %v1532 = vadd.f32 0.0, %v1531
  %v1533 = vpop.f32.mrb[0].mxu0
  %v1534 = vpop.f32.mrb[0].mxu0
  %v1535 = vadd.f32 0.0, %v1534
  %v1536 = vpop.f32.mrb[0].mxu0
  %1537 = vdwg.mxu0
  %v1538 = vmul.f32 %v1532, 0.35355338
  %v1539 = vmul.f32 %v1535, 0.35355338
  %v1540 = vadd.f32 %v1538, %v108
  %v1541 = vadd.f32 %v1539, %v109
  %v1542 = vsel %vm234, %v1540, -inf
  %1543 = vmax.xlane.f32.xlu0 %v1542
  %v1544 = vpop.xlane.xlu0 %1543
  %v1545 = vsel %vm234, %v1541, -inf
  %1546 = vmax.xlane.f32.xlu0 %v1545
  %v1547 = vpop.xlane.xlu0 %1546
  %v1548 = vsub.f32 %v1540, %v1544
  %v1549 = vsub.f32 %v1541, %v1547
  %v1550 = vmul.f32 %v1548, 1.442695
  %v1551 = vpow.pop %v1550
  %v1552 = vmul.f32 %v1549, 1.442695
  %v1553 = vpow.pop %v1552
  %v1554 = vsel %vm234, %v1551, 0.0
  %1555 = vadd.xlane.f32.xlu0 %v1554
  %v1556 = vpop.xlane.xlu0 %1555
  %v1557 = vsel %vm234, %v1553, 0.0
  %1558 = vadd.xlane.f32.xlu0 %v1557
  %v1559 = vpop.xlane.xlu0 %1558
  %v1560 = vrcp.pop %v1556
  %v1561 = vrcp.pop %v1559
  %v1562 = vmul.f32 %v1551, %v1560
  %v1563 = vmul.f32 %v1553, %v1561
  %v1564 = vpack.c.bf16 %v1563, %v1562
  %1565 = vrot.lane.b32.xlu0 %v1112, 40
  %v1566 = vpop.permute.xlu0 %1565
  %v1569 = vsel %vm234, %v1564, 0
  %1571 = vmatprep.subr.bf16.mxu0 0
  %1572 = vmatpush1.bf16.msra.mxu0 %v1566
  %1573 = vmatprep.subr.bf16.mxu0 0
  %1574 = vmatpush1.bf16.msra.mxu0 0
  %1575 = vmatprep.subr.bf16.mxu0 0
  %1576 = vmatpush1.bf16.msra.mxu0 0
  %1577 = vmatprep.subr.bf16.mxu0 0
  %1578 = vmatpush1.bf16.msra.mxu0 0
  %1579 = vmatprep.subr.bf16.mxu0 0
  %1580 = vmatpush1.bf16.msra.mxu0 0
  %1581 = vmatprep.subr.bf16.mxu0 0
  %1582 = vmatpush1.bf16.msra.mxu0 0
  %1583 = vmatprep.subr.bf16.mxu0 0
  %1584 = vmatpush1.bf16.msra.mxu0 0
  %1585 = vmatprep.subr.bf16.mxu0 0
  %1586 = vmatpush1.bf16.msra.mxu0 0
  %1587 = vmatprep.subr.bf16.mxu0 0
  %1588 = vmatpush1.bf16.msra.mxu0 0
  %1589 = vmatprep.subr.bf16.mxu0 0
  %1590 = vmatpush1.bf16.msra.mxu0 0
  %1591 = vmatprep.subr.bf16.mxu0 0
  %1592 = vmatpush1.bf16.msra.mxu0 0
  %1593 = vmatprep.subr.bf16.mxu0 0
  %1594 = vmatpush1.bf16.msra.mxu0 0
  %1595 = vmatprep.subr.bf16.mxu0 0
  %1596 = vmatpush1.bf16.msra.mxu0 0
  %1597 = vmatprep.subr.bf16.mxu0 0
  %1598 = vmatpush1.bf16.msra.mxu0 0
  %1599 = vmatprep.subr.bf16.mxu0 0
  %1600 = vmatpush1.bf16.msra.mxu0 0
  %1601 = vmatprep.subr.bf16.mxu0 0
  %1602 = vmatpush1.bf16.msra.mxu0 0
  %1603 = vmatprep.mubr.bf16.mxu0 0
  %1604 = vmatmul.mubr.bf16.gmra.mrb[0].mxu0 %v1569
  %v1605 = vpop.f32.mrb[0].mxu0
  %v1606 = vadd.f32 0.0, %v1605
  %v1607 = vpop.f32.mrb[0].mxu0
  %v1608 = vpop.f32.mrb[0].mxu0
  %v1609 = vadd.f32 0.0, %v1608
  %v1610 = vpop.f32.mrb[0].mxu0
  %1611 = vdwg.mxu0
  %1614 = vrot.lane.b32.xlu0 %v1356, 8
  %v1615 = vpop.permute.xlu0 %1614
  %1616 = vrot.lane.b32.xlu0 %v1359, 8
  %v1617 = vpop.permute.xlu0 %1616
  %1622 = vrot.lane.b32.xlu0 %v1481, 16
  %v1623 = vpop.permute.xlu0 %1622
  %1624 = vrot.lane.b32.xlu0 %v1484, 16
  %v1625 = vpop.permute.xlu0 %1624
  %1630 = vrot.lane.b32.xlu0 %v1606, 24
  %v1631 = vpop.permute.xlu0 %1630
  %1632 = vrot.lane.b32.xlu0 %v1609, 24
  %v1633 = vpop.permute.xlu0 %1632
  %v1636 = vsel %vm182, %v1231, %v1615
  %v1637 = vsel %vm182, %v1234, %v1617
  %v1638 = vsel %vm234, %v1636, %v1623
  %v1639 = vsel %vm234, %v1637, %v1625
  %v1640 = vsel %vm708, %v1638, %v1631
  %v1641 = vsel %vm708, %v1639, %v1633
  %v1642 = vpack.c.bf16 %v1641, %v1640
  %s1643 = scalar_lea.vmem %s6, 16
  %v1644 = vld [vmem:[%s1643] sm:$0xf]
  %v1645 = vld [vmem:[%s1643 + $0x4] sm:$0xf]
  %v1646 = vld [vmem:[%s1643 + $0x8] sm:$0xf]
  %v1647 = vld [vmem:[%s1643 + $0xc] sm:$0xf]
  %s1648 = scalar_lea.vmem %s7, 1
  %v1649 = vld [vmem:[%s1648] sm:$0x1]
  %v1651 = vlaneseq
  %v1652 = vshrl.u32 %v1651, 7
  %v1653 = vsub.s32 0, %v1652
  %v1654 = vrot.slane %v1649, %v1653
  %v1660 = vunpack.c.l.b16 %v1644
  %v1661 = vunpack.c.l.b16 %v1645
  %v1662 = vunpack.c.l.b16 %v1646
  %v1663 = vunpack.c.l.b16 %v1647
  %v1664 = vpack.c.b16 %v1661, %v1660
  %v1665 = vpack.c.b16 %v1663, %v1662
  %v1669 = vsel %vm64, %v1642, 0
  %1671 = vmatprep.subr.bf16.mxu0 0
  %1672 = vmatpush1.bf16.msra.mxu0 %v1664
  %1673 = vmatprep.subr.bf16.mxu0 0
  %1674 = vmatpush1.bf16.msra.mxu0 %v1665
  %1675 = vmatprep.subr.bf16.mxu0 0
  %1676 = vmatpush1.bf16.msra.mxu0 0
  %1677 = vmatprep.subr.bf16.mxu0 0
  %1678 = vmatpush1.bf16.msra.mxu0 0
  %1679 = vmatprep.subr.bf16.mxu0 0
  %1680 = vmatpush1.bf16.msra.mxu0 0
  %1681 = vmatprep.subr.bf16.mxu0 0
  %1682 = vmatpush1.bf16.msra.mxu0 0
  %1683 = vmatprep.subr.bf16.mxu0 0
  %1684 = vmatpush1.bf16.msra.mxu0 0
  %1685 = vmatprep.subr.bf16.mxu0 0
  %1686 = vmatpush1.bf16.msra.mxu0 0
  %1687 = vmatprep.subr.bf16.mxu0 0
  %1688 = vmatpush1.bf16.msra.mxu0 0
  %1689 = vmatprep.subr.bf16.mxu0 0
  %1690 = vmatpush1.bf16.msra.mxu0 0
  %1691 = vmatprep.subr.bf16.mxu0 0
  %1692 = vmatpush1.bf16.msra.mxu0 0
  %1693 = vmatprep.subr.bf16.mxu0 0
  %1694 = vmatpush1.bf16.msra.mxu0 0
  %1695 = vmatprep.subr.bf16.mxu0 0
  %1696 = vmatpush1.bf16.msra.mxu0 0
  %1697 = vmatprep.subr.bf16.mxu0 0
  %1698 = vmatpush1.bf16.msra.mxu0 0
  %1699 = vmatprep.subr.bf16.mxu0 0
  %1700 = vmatpush1.bf16.msra.mxu0 0
  %1701 = vmatprep.subr.bf16.mxu0 0
  %1702 = vmatpush1.bf16.msra.mxu0 0
  %1703 = vmatprep.mubr.bf16.mxu0 0
  %1704 = vmatmul.mubr.bf16.gmra.mrb[0].mxu0 %v1669
  %v1705 = vpop.f32.mrb[0].mxu0
  %v1706 = vadd.f32 %v1654, %v1705
  %v1707 = vpop.f32.mrb[0].mxu0
  %v1708 = vpop.f32.mrb[0].mxu0
  %v1709 = vadd.f32 %v1654, %v1708
  %v1710 = vpop.f32.mrb[0].mxu0
  %1711 = vdwg.mxu0
  %v1712 = vadd.f32 %v1040, %v1706
  %v1713 = vadd.f32 %v1041, %v1709
  %s1714 = scalar_lea.vmem %s8, 1
  %v1715 = vld [vmem:[%s1714] sm:$0x1]
  %s1716 = scalar_lea.vmem %s9, 1
  %v1717 = vld [vmem:[%s1716] sm:$0x1]
  %v1718 = vsel %vm64, %v1712, 0.0
  %1719 = vadd.xlane.f32.xlu0 %v1718
  %v1720 = vpop.xlane.xlu0 %1719
  %v1721 = vsel %vm64, %v1713, 0.0
  %1722 = vadd.xlane.f32.xlu0 %v1721
  %v1723 = vpop.xlane.xlu0 %1722
  %v1724 = vmul.f32 %v1720, %v71
  %v1725 = vmul.f32 %v1723, %v71
  %v1726 = vsub.f32 %v1712, %v1724
  %v1727 = vsub.f32 %v1713, %v1725
  %v1728 = vmul.f32 %v1726, %v1726
  %v1729 = vmul.f32 %v1727, %v1727
  %v1730 = vsel %vm64, %v1728, 0.0
  %1731 = vadd.xlane.f32.xlu0 %v1730
  %v1732 = vpop.xlane.xlu0 %1731
  %v1733 = vsel %vm64, %v1729, 0.0
  %1734 = vadd.xlane.f32.xlu0 %v1733
  %v1735 = vpop.xlane.xlu0 %1734
  %v1736 = vmul.f32 %v1732, %v71
  %v1737 = vmul.f32 %v1735, %v71
  %v1738 = vadd.f32 %v1736, 1e-05
  %v1739 = vadd.f32 %v1737, 1e-05
  %v1740 = vrsqrt.pop %v1738
  %v1741 = vrsqrt.pop %v1739
  %v1742 = vmul.f32 %v1726, %v1740
  %v1743 = vmul.f32 %v1727, %v1741
  %v1745 = vlaneseq
  %v1746 = vshrl.u32 %v1745, 7
  %v1747 = vsub.s32 0, %v1746
  %v1748 = vrot.slane %v1715, %v1747
  %v1750 = vmul.f32 %v1742, %v1748
  %v1751 = vmul.f32 %v1743, %v1748
  %v1753 = vlaneseq
  %v1754 = vshrl.u32 %v1753, 7
  %v1755 = vsub.s32 0, %v1754
  %v1756 = vrot.slane %v1717, %v1755
  %v1758 = vadd.f32 %v1750, %v1756
  %v1759 = vadd.f32 %v1751, %v1756
  %v1760 = vpack.c.bf16 %v1759, %v1758
  %s1761 = scalar_lea.vmem %s10, 16
  %v1762 = vld [vmem:[%s1761] sm:$0xf]
  %v1763 = vld [vmem:[%s1761 + $0x4] sm:$0xf]
  %v1764 = vld [vmem:[%s1761 + $0x8] sm:$0xf]
  %v1765 = vld [vmem:[%s1761 + $0xc] sm:$0xf]
  %s1766 = scalar_lea.vmem %s11, 1
  %v1767 = vld [vmem:[%s1766] sm:$0x1]
  %v1769 = vlaneseq
  %v1770 = vshrl.u32 %v1769, 7
  %v1771 = vsub.s32 0, %v1770
  %v1772 = vrot.slane %v1767, %v1771
  %v1778 = vunpack.c.l.b16 %v1762
  %v1779 = vunpack.c.l.b16 %v1763
  %v1780 = vunpack.c.l.b16 %v1764
  %v1781 = vunpack.c.l.b16 %v1765
  %v1782 = vpack.c.b16 %v1779, %v1778
  %v1783 = vpack.c.b16 %v1781, %v1780
  %v1787 = vsel %vm64, %v1760, 0
  %1789 = vmatprep.subr.bf16.mxu0 0
  %1790 = vmatpush1.bf16.msra.mxu0 %v1782
  %1791 = vmatprep.subr.bf16.mxu0 0
  %1792 = vmatpush1.bf16.msra.mxu0 %v1783
  %1793 = vmatprep.subr.bf16.mxu0 0
  %1794 = vmatpush1.bf16.msra.mxu0 0
  %1795 = vmatprep.subr.bf16.mxu0 0
  %1796 = vmatpush1.bf16.msra.mxu0 0
  %1797 = vmatprep.subr.bf16.mxu0 0
  %1798 = vmatpush1.bf16.msra.mxu0 0
  %1799 = vmatprep.subr.bf16.mxu0 0
  %1800 = vmatpush1.bf16.msra.mxu0 0
  %1801 = vmatprep.subr.bf16.mxu0 0
  %1802 = vmatpush1.bf16.msra.mxu0 0
  %1803 = vmatprep.subr.bf16.mxu0 0
  %1804 = vmatpush1.bf16.msra.mxu0 0
  %1805 = vmatprep.subr.bf16.mxu0 0
  %1806 = vmatpush1.bf16.msra.mxu0 0
  %1807 = vmatprep.subr.bf16.mxu0 0
  %1808 = vmatpush1.bf16.msra.mxu0 0
  %1809 = vmatprep.subr.bf16.mxu0 0
  %1810 = vmatpush1.bf16.msra.mxu0 0
  %1811 = vmatprep.subr.bf16.mxu0 0
  %1812 = vmatpush1.bf16.msra.mxu0 0
  %1813 = vmatprep.subr.bf16.mxu0 0
  %1814 = vmatpush1.bf16.msra.mxu0 0
  %1815 = vmatprep.subr.bf16.mxu0 0
  %1816 = vmatpush1.bf16.msra.mxu0 0
  %1817 = vmatprep.subr.bf16.mxu0 0
  %1818 = vmatpush1.bf16.msra.mxu0 0
  %1819 = vmatprep.subr.bf16.mxu0 0
  %1820 = vmatpush1.bf16.msra.mxu0 0
  %1821 = vmatprep.mubr.bf16.mxu0 0
  %1822 = vmatmul.mubr.bf16.gmra.mrb[0].mxu0 %v1787
  %v1823 = vpop.f32.mrb[0].mxu0
  %v1824 = vadd.f32 %v1772, %v1823
  %v1825 = vpop.f32.mrb[0].mxu0
  %v1826 = vpop.f32.mrb[0].mxu0
  %v1827 = vadd.f32 %v1772, %v1826
  %v1828 = vpop.f32.mrb[0].mxu0
  %1829 = vdwg.mxu0
  %v1830 = vmul.f32 %v1824, %v1824
  %v1831 = vmul.f32 %v1827, %v1827
  %v1832 = vmul.f32 %v1824, %v1830
  %v1833 = vmul.f32 %v1827, %v1831
  %v1834 = vmul.f32 %v1832, 0.044715
  %v1835 = vmul.f32 %v1833, 0.044715
  %v1836 = vadd.f32 %v1824, %v1834
  %v1837 = vadd.f32 %v1827, %v1835
  %v1838 = vmul.f32 %v1836, 0.7978846
  %v1839 = vmul.f32 %v1837, 0.7978846
  %v1840 = vtanh.pop %v1838
  %v1841 = vtanh.pop %v1839
  %v1842 = vadd.f32 %v1840, 1.0
  %v1843 = vadd.f32 %v1841, 1.0
  %v1844 = vmul.f32 %v1842, 0.5
  %v1845 = vmul.f32 %v1843, 0.5
  %v1846 = vmul.f32 %v1824, %v1844
  %v1847 = vmul.f32 %v1827, %v1845
  %v1848 = vpack.c.bf16 %v1847, %v1846
  %s1849 = scalar_lea.vmem %s12, 32
  %v1850 = vld [vmem:[%s1849] sm:$0xf]
  %v1851 = vld [vmem:[%s1849 + $0x4] sm:$0xf]
  %v1852 = vld [vmem:[%s1849 + $0x8] sm:$0xf]
  %v1853 = vld [vmem:[%s1849 + $0xc] sm:$0xf]
  %v1854 = vld [vmem:[%s1849 + $0x10] sm:$0xf]
  %v1855 = vld [vmem:[%s1849 + $0x14] sm:$0xf]
  %v1856 = vld [vmem:[%s1849 + $0x18] sm:$0xf]
  %v1857 = vld [vmem:[%s1849 + $0x1c] sm:$0xf]
  %s1858 = scalar_lea.vmem %s13, 1
  %v1859 = vld [vmem:[%s1858] sm:$0x1]
  %v1861 = vlaneseq
  %v1862 = vshrl.u32 %v1861, 7
  %v1863 = vsub.s32 0, %v1862
  %v1864 = vrot.slane %v1859, %v1863
  %v1874 = vunpack.c.l.b16 %v1850
  %v1875 = vunpack.c.l.b16 %v1851
  %v1876 = vunpack.c.l.b16 %v1852
  %v1877 = vunpack.c.l.b16 %v1853
  %v1878 = vunpack.c.l.b16 %v1854
  %v1879 = vunpack.c.l.b16 %v1855
  %v1880 = vunpack.c.l.b16 %v1856
  %v1881 = vunpack.c.l.b16 %v1857
  %v1882 = vpack.c.b16 %v1875, %v1874
  %v1883 = vpack.c.b16 %v1877, %v1876
  %v1884 = vpack.c.b16 %v1879, %v1878
  %v1885 = vpack.c.b16 %v1881, %v1880
  %v1891 = vsel %vm951, %v1848, 0
  %1893 = vmatprep.subr.bf16.mxu0 0
  %1894 = vmatpush1.bf16.msra.mxu0 %v1882
  %1895 = vmatprep.subr.bf16.mxu0 0
  %1896 = vmatpush1.bf16.msra.mxu0 %v1883
  %1897 = vmatprep.subr.bf16.mxu0 0
  %1898 = vmatpush1.bf16.msra.mxu0 %v1884
  %1899 = vmatprep.subr.bf16.mxu0 0
  %1900 = vmatpush1.bf16.msra.mxu0 %v1885
  %1901 = vmatprep.subr.bf16.mxu0 0
  %1902 = vmatpush1.bf16.msra.mxu0 0
  %1903 = vmatprep.subr.bf16.mxu0 0
  %1904 = vmatpush1.bf16.msra.mxu0 0
  %1905 = vmatprep.subr.bf16.mxu0 0
  %1906 = vmatpush1.bf16.msra.mxu0 0
  %1907 = vmatprep.subr.bf16.mxu0 0
  %1908 = vmatpush1.bf16.msra.mxu0 0
  %1909 = vmatprep.subr.bf16.mxu0 0
  %1910 = vmatpush1.bf16.msra.mxu0 0
  %1911 = vmatprep.subr.bf16.mxu0 0
  %1912 = vmatpush1.bf16.msra.mxu0 0
  %1913 = vmatprep.subr.bf16.mxu0 0
  %1914 = vmatpush1.bf16.msra.mxu0 0
  %1915 = vmatprep.subr.bf16.mxu0 0
  %1916 = vmatpush1.bf16.msra.mxu0 0
  %1917 = vmatprep.subr.bf16.mxu0 0
  %1918 = vmatpush1.bf16.msra.mxu0 0
  %1919 = vmatprep.subr.bf16.mxu0 0
  %1920 = vmatpush1.bf16.msra.mxu0 0
  %1921 = vmatprep.subr.bf16.mxu0 0
  %1922 = vmatpush1.bf16.msra.mxu0 0
  %1923 = vmatprep.subr.bf16.mxu0 0
  %1924 = vmatpush1.bf16.msra.mxu0 0
  %1925 = vmatprep.mubr.bf16.mxu0 0
  %1926 = vmatmul.mubr.bf16.gmra.mrb[0].mxu0 %v1891
  %v1927 = vpop.f32.mrb[0].mxu0
  %v1928 = vadd.f32 %v1864, %v1927
  %v1929 = vpop.f32.mrb[0].mxu0
  %v1930 = vpop.f32.mrb[0].mxu0
  %v1931 = vadd.f32 %v1864, %v1930
  %v1932 = vpop.f32.mrb[0].mxu0
  %1933 = vdwg.mxu0
  %v1934 = vadd.f32 %v1758, %v1928
  %v1935 = vadd.f32 %v1759, %v1931
  %s1936 = scalar_lea.vmem %s14, 1
  %v1937 = vld [vmem:[%s1936] sm:$0x1]
  %s1938 = scalar_lea.vmem %s15, 1
  %v1939 = vld [vmem:[%s1938] sm:$0x1]
  %v1940 = vsel %vm64, %v1934, 0.0
  %1941 = vadd.xlane.f32.xlu0 %v1940
  %v1942 = vpop.xlane.xlu0 %1941
  %v1943 = vsel %vm64, %v1935, 0.0
  %1944 = vadd.xlane.f32.xlu0 %v1943
  %v1945 = vpop.xlane.xlu0 %1944
  %v1946 = vmul.f32 %v1942, %v71
  %v1947 = vmul.f32 %v1945, %v71
  %v1948 = vsub.f32 %v1934, %v1946
  %v1949 = vsub.f32 %v1935, %v1947
  %v1950 = vmul.f32 %v1948, %v1948
  %v1951 = vmul.f32 %v1949, %v1949
  %v1952 = vsel %vm64, %v1950, 0.0
  %1953 = vadd.xlane.f32.xlu0 %v1952
  %v1954 = vpop.xlane.xlu0 %1953
  %v1955 = vsel %vm64, %v1951, 0.0
  %1956 = vadd.xlane.f32.xlu0 %v1955
  %v1957 = vpop.xlane.xlu0 %1956
  %v1958 = vmul.f32 %v1954, %v71
  %v1959 = vmul.f32 %v1957, %v71
  %v1960 = vadd.f32 %v1958, 1e-05
  %v1961 = vadd.f32 %v1959, 1e-05
  %v1962 = vrsqrt.pop %v1960
  %v1963 = vrsqrt.pop %v1961
  %v1964 = vmul.f32 %v1948, %v1962
  %v1965 = vmul.f32 %v1949, %v1963
  %v1967 = vlaneseq
  %v1968 = vshrl.u32 %v1967, 7
  %v1969 = vsub.s32 0, %v1968
  %v1970 = vrot.slane %v1937, %v1969
  %v1972 = vmul.f32 %v1964, %v1970
  %v1973 = vmul.f32 %v1965, %v1970
  %v1975 = vlaneseq
  %v1976 = vshrl.u32 %v1975, 7
  %v1977 = vsub.s32 0, %v1976
  %v1978 = vrot.slane %v1939, %v1977
  %v1980 = vadd.f32 %v1972, %v1978
  %v1981 = vadd.f32 %v1973, %v1978
  %v1982 = vpack.c.bf16 %v1981, %v1980
  %v1983 = vld [vmem:[%s16] sm:$0xf]
  %v1984 = vld [vmem:[%s16 + $0x4] sm:$0xf]
  %v1985 = vld [vmem:[%s16 + $0x8] sm:$0xf]
  %v1986 = vld [vmem:[%s16 + $0xc] sm:$0xf]
  %v1987 = vld [vmem:[%s17] sm:$0x1]
  %v1989 = vlaneseq
  %v1990 = vshrl.u32 %v1989, 7
  %v1991 = vsub.s32 0, %v1990
  %v1992 = vrot.slane %v1987, %v1991
  %v1998 = vunpack.c.l.b16 %v1983
  %v1999 = vunpack.c.l.b16 %v1984
  %v2000 = vunpack.c.l.b16 %v1985
  %v2001 = vunpack.c.l.b16 %v1986
  %v2002 = vpack.c.b16 %v1999, %v1998
  %v2003 = vpack.c.b16 %v2001, %v2000
  %v2007 = vsel %vm64, %v1982, 0
  %2009 = vmatprep.subr.bf16.mxu0 0
  %2010 = vmatpush1.bf16.msra.mxu0 %v2002
  %2011 = vmatprep.subr.bf16.mxu0 0
  %2012 = vmatpush1.bf16.msra.mxu0 %v2003
  %2013 = vmatprep.subr.bf16.mxu0 0
  %2014 = vmatpush1.bf16.msra.mxu0 0
  %2015 = vmatprep.subr.bf16.mxu0 0
  %2016 = vmatpush1.bf16.msra.mxu0 0
  %2017 = vmatprep.subr.bf16.mxu0 0
  %2018 = vmatpush1.bf16.msra.mxu0 0
  %2019 = vmatprep.subr.bf16.mxu0 0
  %2020 = vmatpush1.bf16.msra.mxu0 0
  %2021 = vmatprep.subr.bf16.mxu0 0
  %2022 = vmatpush1.bf16.msra.mxu0 0
  %2023 = vmatprep.subr.bf16.mxu0 0
  %2024 = vmatpush1.bf16.msra.mxu0 0
  %2025 = vmatprep.subr.bf16.mxu0 0
  %2026 = vmatpush1.bf16.msra.mxu0 0
  %2027 = vmatprep.subr.bf16.mxu0 0
  %2028 = vmatpush1.bf16.msra.mxu0 0
  %2029 = vmatprep.subr.bf16.mxu0 0
  %2030 = vmatpush1.bf16.msra.mxu0 0
  %2031 = vmatprep.subr.bf16.mxu0 0
  %2032 = vmatpush1.bf16.msra.mxu0 0
  %2033 = vmatprep.subr.bf16.mxu0 0
  %2034 = vmatpush1.bf16.msra.mxu0 0
  %2035 = vmatprep.subr.bf16.mxu0 0
  %2036 = vmatpush1.bf16.msra.mxu0 0
  %2037 = vmatprep.subr.bf16.mxu0 0
  %2038 = vmatpush1.bf16.msra.mxu0 0
  %2039 = vmatprep.subr.bf16.mxu0 0
  %2040 = vmatpush1.bf16.msra.mxu0 0
  %2041 = vmatprep.mubr.bf16.mxu0 0
  %2042 = vmatmul.mubr.bf16.gmra.mrb[0].mxu0 %v2007
  %v2043 = vpop.f32.mrb[0].mxu0
  %v2044 = vadd.f32 %v1992, %v2043
  %v2045 = vpop.f32.mrb[0].mxu0
  %v2046 = vpop.f32.mrb[0].mxu0
  %v2047 = vadd.f32 %v1992, %v2046
  %v2048 = vpop.f32.mrb[0].mxu0
  %2049 = vdwg.mxu0
  %2050 = vst [vmem:[%s18] sm:$0xff] %v2044
  %2051 = vst [vmem:[%s18 + $0x8] sm:$0xff] %v2047
  // Predicated region
  $region74: #{multitask_forward.1} parent=0 // pred_check
    _
  $region75: #{multitask_forward.1} parent=0 // pred_check_branch
    %2053 = sbr.rel (0) target = $region77
  $region76: #{multitask_forward.1} parent=0 // pred_region
    _
  $region77: #{multitask_forward.1} parent=0 // pred_fallthru
    _
  // Predicated region
  $region78: #{multitask_forward.1} parent=0 // pred_check
    _
  $region79: #{multitask_forward.1} parent=0 // pred_check_branch
    %2055 = sbr.rel (0) target = $region81
  $region80: #{multitask_forward.1} parent=0 // pred_region
    _
  $region81: #{multitask_forward.1} parent=0 // pred_fallthru
    _

</llo_original>
